<compile_context>
chip_gen: v7x
topology: tpu7x:2x2x1
jax: 0.10.0
libtpu: 0.0.40
codegen_flags: <defaults>
</compile_context>

<pallas_src>
import jax
import jax.numpy as jnp
from jax import lax
from jax.experimental import pallas as pl
from jax.experimental.pallas import tpu as pltpu

L = 50                        # TCN output length (Linear(50, 20))
NUM_CHANNELS = [18, 9, 5, 1]
DILATIONS = [1, 2, 4, 8]      # 2**i, kernel_size = 2
MLP_HIDDEN = 20
MLP_OUT = 2


def _round_up(x, m):
    return (x + m - 1) // m * m


def _slab_layout(channel):
    """Static (row, nrows, ncols) layout of every matrix inside the packed slab."""
    rows = 0
    blocks = []
    ci = channel
    for co in NUM_CHANNELS:
        wa = (rows, 2 * co, 2 * ci + 1)      # [[w1_0 w1_1 b1]; [0 dw db]]
        rows += 2 * co
        wb = (rows, co, 2 * co + 1)          # [w2_0 w2_1 b2]
        rows += co
        blocks.append((wa, wb, ci, co))
        ci = co
    mlp1 = (rows, MLP_HIDDEN, L + 1)         # [W1 | b1]
    rows += MLP_HIDDEN
    mlp2 = (rows, MLP_OUT, MLP_HIDDEN + 1)   # [W2 | b2]
    rows += MLP_OUT
    max_cols = max([L + 1, MLP_HIDDEN + 1]
                   + [2 * c + 1 for c in [channel] + NUM_CHANNELS])
    slab_shape = (_round_up(rows, 8), _round_up(max_cols, 128))
    return blocks, mlp1, mlp2, slab_shape


def _flops_per_example(channel):
    f = 0
    ci = channel
    for co in NUM_CHANNELS:
        f += 2 * (2 * co) * (2 * ci + 1) * L     # fused conv1 + residual
        f += 2 * co * (2 * co + 1) * L           # conv2
        ci = co
    f += 2 * MLP_HIDDEN * (L + 1) + 2 * MLP_OUT * (MLP_HIDDEN + 1)
    return f


def make_params(key, channel):
    """Deterministic parameter init (shapes match the PyTorch module)."""
    keys = jax.random.split(key, 64)
    ki = [0]

    def nxt():
        k = keys[ki[0]]
        ki[0] += 1
        return k

    params = []
    in_ch = channel
    for out_ch in NUM_CHANNELS:
        c1 = 0.1 * jax.random.normal(nxt(), (out_ch, in_ch, 2), jnp.float32)
        c1b = 0.1 * jax.random.normal(nxt(), (out_ch, 1), jnp.float32)
        c2 = 0.1 * jax.random.normal(nxt(), (out_ch, out_ch, 2), jnp.float32)
        c2b = 0.1 * jax.random.normal(nxt(), (out_ch, 1), jnp.float32)
        dw = 0.1 * jax.random.normal(nxt(), (out_ch, in_ch), jnp.float32)
        db = 0.1 * jax.random.normal(nxt(), (out_ch, 1), jnp.float32)
        params += [c1[:, :, 0], c1[:, :, 1], c1b,
                   c2[:, :, 0], c2[:, :, 1], c2b, dw, db]
        in_ch = out_ch

    l1w = 0.1 * jax.random.normal(nxt(), (20, 50), jnp.float32)
    l1b = 0.1 * jax.random.normal(nxt(), (1, 20), jnp.float32)
    l2w = 0.1 * jax.random.normal(nxt(), (2, 20), jnp.float32)
    l2b = 0.1 * jax.random.normal(nxt(), (1, 2), jnp.float32)
    params += [l1w.T, l1b, l2w.T, l2b]
    return params


def pack_params(params, channel):
    """Pack all 36 parameter tensors into one (rows, 128)-aligned f32 slab."""
    blocks, mlp1, mlp2, (R, Ccol) = _slab_layout(channel)
    slab = jnp.zeros((R, Ccol), jnp.float32)
    idx = 0
    for (wa, wb, ci, co) in blocks:
        c1w0, c1w1, c1b, c2w0, c2w1, c2b, dw, db = params[idx:idx + 8]
        idx += 8
        wa_mat = jnp.concatenate(
            [jnp.concatenate([c1w0, c1w1, c1b], axis=1),
             jnp.concatenate([jnp.zeros((co, ci), jnp.float32), dw, db], axis=1)],
            axis=0)                                              # (2*co, 2*ci+1)
        wb_mat = jnp.concatenate([c2w0, c2w1, c2b], axis=1)      # (co, 2*co+1)
        slab = lax.dynamic_update_slice(slab, wa_mat, (wa[0], 0))
        slab = lax.dynamic_update_slice(slab, wb_mat, (wb[0], 0))
    l1wT, l1b, l2wT, l2b = params[idx:idx + 4]
    m1 = jnp.concatenate([l1wT.T, l1b.T], axis=1)                # (20, 51)
    m2 = jnp.concatenate([l2wT.T, l2b.T], axis=1)                # (2, 21)
    slab = lax.dynamic_update_slice(slab, m1, (mlp1[0], 0))
    slab = lax.dynamic_update_slice(slab, m2, (mlp2[0], 0))
    return slab


def _make_kernel(channel, TB, compute_dtype):
    blocks, mlp1, mlp2, _ = _slab_layout(channel)
    W = L * TB
    f32 = jnp.float32

    def kernel(x_ref, w_ref, o_ref):
        ones_w = jnp.ones((1, W), f32)

        def shift(x, s):
            # causal shift by d time-steps == s = d*TB lanes (zeros shifted in);
            # exactly reproduces Conv1d left-padding + Chomp1d.
            return jnp.concatenate(
                [jnp.zeros((x.shape[0], s), f32), x[:, :W - s]], axis=1)

        def mm(a, b):
            return jnp.dot(a.astype(compute_dtype), b.astype(compute_dtype),
                           preferred_element_type=f32)

        h = x_ref[0].astype(f32)              # (C_in, L*TB), lane j = t*TB + b

        for (wa, wb, _ci, co), d in zip(blocks, DILATIONS):
            s = d * TB
            ra, ma, ka = wa
            rb, mb, kb = wb
            WA = w_ref[ra:ra + ma, 0:ka]      # [[w1_0 w1_1 b1]; [0 dw db]]
            WB = w_ref[rb:rb + mb, 0:kb]      # [w2_0 w2_1 b2]
            x1 = jnp.concatenate([shift(h, s), h, ones_w], axis=0)
            y = mm(WA, x1)                    # rows [:co]=conv1 pre, [co:]=residual
            a1 = jnp.maximum(y[:co], 0.0)     # ReLU after conv1
            res = y[co:]
            x2 = jnp.concatenate([shift(a1, s), a1, ones_w], axis=0)
            a2 = jnp.maximum(mm(WB, x2), 0.0)  # ReLU after conv2
            h = jnp.maximum(a2 + res, 0.0)     # block-output ReLU

        # h: (1, L*TB) -> h2: (L+1, TB): per-batch time vectors (+ ones row for bias)
        h2 = jnp.concatenate(
            [h[:, t * TB:(t + 1) * TB] for t in range(L)] + [ones_w[:, :TB]],
            axis=0)

        r1, m1r, k1 = mlp1
        r2, m2r, _ = mlp2
        z1 = jnp.clip(mm(w_ref[r1:r1 + m1r, 0:k1], h2), 0.0, 6.0)   # (20,TB) ReLU6
        w2 = w_ref[r2:r2 + m2r, 0:MLP_HIDDEN]
        b2 = w_ref[r2:r2 + m2r, MLP_HIDDEN:MLP_HIDDEN + 1]
        z2 = mm(w2, z1) + b2                                        # (2, TB)
        z2 = z2 - jnp.max(z2, axis=0, keepdims=True)                # softmax
        e = jnp.exp(z2)
        o_ref[0] = (e / jnp.sum(e, axis=0, keepdims=True)).astype(o_ref.dtype)

    return kernel


def nirs_tcn_forward(x, slab, *, batch_tile=None, compute_dtype=jnp.float32):
    """x: (B, C, 50) -> (B, 2).  slab: packed params from pack_params().

    compute_dtype=jnp.bfloat16 is recommended on v6e/v7x for throughput
    (f32 accumulation is kept); default f32 matches PyTorch numerics.
    """
    B, C, Lx = x.shape
    assert Lx == L, "TCN sequence length must be 50 (Linear(50, 20))"
    assert slab.shape == _slab_layout(C)[3]

    if batch_tile is None:
        # lane width = L*TB; 256 keeps it 128-aligned and well under v7x VMEM.
        batch_tile = 256 if B >= 256 else _round_up(max(B, 8), 8)
    TB = int(batch_tile)
    B_pad = _round_up(B, TB)
    nbt = B_pad // TB
    if B_pad != B:
        x = jnp.concatenate([x, jnp.zeros((B_pad - B, C, L), x.dtype)], axis=0)

    # (B_pad,C,L) -> (nbt,TB,C,L) -> (nbt,C,L,TB) -> (nbt,C,L*TB): lane j = t*TB+b
    xt = x.reshape(nbt, TB, C, L).transpose(0, 2, 3, 1).reshape(nbt, C, L * TB)

    R, Ccol = slab.shape
    kernel = _make_kernel(C, TB, compute_dtype)
    cost = pl.CostEstimate(
        flops=B_pad * _flops_per_example(C),
        transcendentals=2 * B_pad,
        bytes_accessed=xt.size * 4 + nbt * MLP_OUT * TB * 4 + R * Ccol * 4)

    out = pl.pallas_call(
        kernel,
        out_shape=jax.ShapeDtypeStruct((nbt, MLP_OUT, TB), jnp.float32),
        grid_spec=pltpu.PrefetchScalarGridSpec(
            num_scalar_prefetch=0,
            grid=(nbt,),
            in_specs=[pl.BlockSpec((1, C, L * TB), lambda bt: (bt, 0, 0)),
                      pl.BlockSpec((R, Ccol), lambda bt: (0, 0))],
            out_specs=pl.BlockSpec((1, MLP_OUT, TB), lambda bt: (bt, 0, 0)),
        ),
        compiler_params=pltpu.CompilerParams(
            dimension_semantics=("parallel",)),
        cost_estimate=cost,
    )(xt, slab)

    return out.transpose(0, 2, 1).reshape(B_pad, MLP_OUT)[:B]


def ref_forward(x, params):
    """Pure-JAX reference for correctness checking."""
    h = x
    idx = 0
    for out_ch, d in zip(NUM_CHANNELS, DILATIONS):
        c1w0, c1w1, c1b, c2w0, c2w1, c2b, dw, db = params[idx:idx + 8]
        idx += 8

        def conv(xin, w0, w1, b):
            xprev = jnp.pad(xin, ((0, 0), (0, 0), (d, 0)))[:, :, :L]
            return (jnp.einsum('oi,bil->bol', w0, xprev)
                    + jnp.einsum('oi,bil->bol', w1, xin) + b[None])

        out = jax.nn.relu(conv(h, c1w0, c1w1, c1b))
        out = jax.nn.relu(conv(out, c2w0, c2w1, c2b))
        res = jnp.einsum('oi,bil->bol', dw, h) + db[None]
        h = jax.nn.relu(out + res)
    z = h[:, 0, :]                                 # squeeze (B, 1, 50) -> (B, 50)
    l1wT, l1b, l2wT, l2b = params[idx:idx + 4]
    z = jnp.clip(z @ l1wT + l1b, 0.0, 6.0)
    z = z @ l2wT + l2b
    return jax.nn.softmax(z, axis=-1)


if __name__ == "__main__":
    key = jax.random.PRNGKey(0)
    k_x, k_p = jax.random.split(key)

    B, C = 2, 4                                    # small shapes; L fixed at 50
    x = jax.random.normal(k_x, (B, C, L), jnp.float32)
    params = make_params(k_p, C)
    slab = pack_params(params, C)

    out = jax.block_until_ready(nirs_tcn_forward(x, slab))
    ref = ref_forward(x, params)
    assert out.shape == (B, 2)
    assert jnp.allclose(out, ref, atol=1e-4, rtol=1e-4), (out, ref)

    # Multi-tile grid path: B=20 with TB=8 -> 3 batch tiles + padding.
    x2 = jax.random.normal(jax.random.PRNGKey(1), (20, C, L), jnp.float32)
    out2 = jax.block_until_ready(nirs_tcn_forward(x2, slab, batch_tile=8))
    ref2 = ref_forward(x2, params)
    assert out2.shape == (20, 2)
    assert jnp.allclose(out2, ref2, atol=1e-4, rtol=1e-4), (out2, ref2)

    print("KERNEL_OK")
</pallas_src>

<mosaic_0001>
module attributes {stable_mosaic.version = 11 : i64} {
  func.func @kernel(%arg0: i32, %arg1: memref<1x4x400xf32, #tpu.memory_space<vmem>>, %arg2: memref<128x128xf32, #tpu.memory_space<vmem>>, %arg3: memref<1x2x8xf32, #tpu.memory_space<vmem>>) attributes {dimension_semantics = [#tpu.dimension_semantics<parallel>], iteration_bounds = array<i64: 1>, scalar_prefetch = 0 : i64, scratch_operands = 0 : i64, tpu.core_type = #tpu.core_type<tc>, window_params = [{transform_indices = @transform_0, window_bounds = array<i64: 1, 4, 400>}, {pipeline_mode = #tpu.pipeline_mode<synchronous>, transform_indices = @transform_1, window_bounds = array<i64: 128, 128>}, {transform_indices = @transform_2, window_bounds = array<i64: 1, 2, 8>}]} {
    %cst = arith.constant 1.000000e+00 : f32
    %0 = vector.broadcast %cst : f32 to vector<1x400xf32>
    %c0 = arith.constant 0 : index
    %c0_0 = arith.constant 0 : index
    %c0_1 = arith.constant 0 : index
    %1 = vector.load %arg1[%c0, %c0_0, %c0_1] : memref<1x4x400xf32, #tpu.memory_space<vmem>>, vector<1x4x400xf32>
    %2 = vector.shape_cast %1 : vector<1x4x400xf32> to vector<4x400xf32>
    %c0_2 = arith.constant 0 : index
    %c0_3 = arith.constant 0 : index
    %3 = vector.load %arg2[%c0_2, %c0_3] : memref<128x128xf32, #tpu.memory_space<vmem>>, vector<36x9xf32>
    %c36 = arith.constant 36 : index
    %c0_4 = arith.constant 0 : index
    %4 = vector.load %arg2[%c36, %c0_4] : memref<128x128xf32, #tpu.memory_space<vmem>>, vector<18x37xf32>
    %cst_5 = arith.constant 0.000000e+00 : f32
    %5 = vector.broadcast %cst_5 : f32 to vector<4x8xf32>
    %6 = vector.extract_strided_slice %2 {offsets = [0, 0], sizes = [4, 392], strides = [1, 1]} : vector<4x400xf32> to vector<4x392xf32>
    %7 = tpu.concatenate %5, %6 in 1 : vector<4x8xf32>, vector<4x392xf32> -> vector<4x400xf32>
    %8 = tpu.concatenate %7, %2, %0 in 0 : vector<4x400xf32>, vector<4x400xf32>, vector<1x400xf32> -> vector<9x400xf32>
    %cst_6 = arith.constant dense<0.000000e+00> : vector<36x400xf32>
    %9 = tpu.matmul %3, %8, %cst_6 {dimension_numbers = #tpu.dot_dimension_numbers<[1], [0], [0], [1], [0, 0, 1, 1], [], []>} : vector<36x9xf32>, vector<9x400xf32>, vector<36x400xf32> -> vector<36x400xf32>
    %10 = vector.extract_strided_slice %9 {offsets = [0, 0], sizes = [18, 400], strides = [1, 1]} : vector<36x400xf32> to vector<18x400xf32>
    %cst_7 = arith.constant 0.000000e+00 : f32
    %11 = vector.broadcast %cst_7 : f32 to vector<18x400xf32>
    %12 = arith.maximumf %10, %11 : vector<18x400xf32>
    %13 = vector.extract_strided_slice %9 {offsets = [18, 0], sizes = [18, 400], strides = [1, 1]} : vector<36x400xf32> to vector<18x400xf32>
    %cst_8 = arith.constant 0.000000e+00 : f32
    %14 = vector.broadcast %cst_8 : f32 to vector<18x8xf32>
    %15 = vector.extract_strided_slice %12 {offsets = [0, 0], sizes = [18, 392], strides = [1, 1]} : vector<18x400xf32> to vector<18x392xf32>
    %16 = tpu.concatenate %14, %15 in 1 : vector<18x8xf32>, vector<18x392xf32> -> vector<18x400xf32>
    %17 = tpu.concatenate %16, %12, %0 in 0 : vector<18x400xf32>, vector<18x400xf32>, vector<1x400xf32> -> vector<37x400xf32>
    %cst_9 = arith.constant dense<0.000000e+00> : vector<18x400xf32>
    %18 = tpu.matmul %4, %17, %cst_9 {dimension_numbers = #tpu.dot_dimension_numbers<[1], [0], [0], [1], [0, 0, 1, 1], [], []>} : vector<18x37xf32>, vector<37x400xf32>, vector<18x400xf32> -> vector<18x400xf32>
    %cst_10 = arith.constant 0.000000e+00 : f32
    %19 = vector.broadcast %cst_10 : f32 to vector<18x400xf32>
    %20 = arith.maximumf %18, %19 : vector<18x400xf32>
    %21 = arith.addf %20, %13 : vector<18x400xf32>
    %cst_11 = arith.constant 0.000000e+00 : f32
    %22 = vector.broadcast %cst_11 : f32 to vector<18x400xf32>
    %23 = arith.maximumf %21, %22 : vector<18x400xf32>
    %c54 = arith.constant 54 : index
    %c0_12 = arith.constant 0 : index
    %24 = vector.load %arg2[%c54, %c0_12] : memref<128x128xf32, #tpu.memory_space<vmem>>, vector<18x37xf32>
    %c72 = arith.constant 72 : index
    %c0_13 = arith.constant 0 : index
    %25 = vector.load %arg2[%c72, %c0_13] : memref<128x128xf32, #tpu.memory_space<vmem>>, vector<9x19xf32>
    %cst_14 = arith.constant 0.000000e+00 : f32
    %26 = vector.broadcast %cst_14 : f32 to vector<18x16xf32>
    %27 = vector.extract_strided_slice %23 {offsets = [0, 0], sizes = [18, 384], strides = [1, 1]} : vector<18x400xf32> to vector<18x384xf32>
    %28 = tpu.concatenate %26, %27 in 1 : vector<18x16xf32>, vector<18x384xf32> -> vector<18x400xf32>
    %29 = tpu.concatenate %28, %23, %0 in 0 : vector<18x400xf32>, vector<18x400xf32>, vector<1x400xf32> -> vector<37x400xf32>
    %cst_15 = arith.constant dense<0.000000e+00> : vector<18x400xf32>
    %30 = tpu.matmul %24, %29, %cst_15 {dimension_numbers = #tpu.dot_dimension_numbers<[1], [0], [0], [1], [0, 0, 1, 1], [], []>} : vector<18x37xf32>, vector<37x400xf32>, vector<18x400xf32> -> vector<18x400xf32>
    %31 = vector.extract_strided_slice %30 {offsets = [0, 0], sizes = [9, 400], strides = [1, 1]} : vector<18x400xf32> to vector<9x400xf32>
    %cst_16 = arith.constant 0.000000e+00 : f32
    %32 = vector.broadcast %cst_16 : f32 to vector<9x400xf32>
    %33 = arith.maximumf %31, %32 : vector<9x400xf32>
    %34 = vector.extract_strided_slice %30 {offsets = [9, 0], sizes = [9, 400], strides = [1, 1]} : vector<18x400xf32> to vector<9x400xf32>
    %cst_17 = arith.constant 0.000000e+00 : f32
    %35 = vector.broadcast %cst_17 : f32 to vector<9x16xf32>
    %36 = vector.extract_strided_slice %33 {offsets = [0, 0], sizes = [9, 384], strides = [1, 1]} : vector<9x400xf32> to vector<9x384xf32>
    %37 = tpu.concatenate %35, %36 in 1 : vector<9x16xf32>, vector<9x384xf32> -> vector<9x400xf32>
    %38 = tpu.concatenate %37, %33, %0 in 0 : vector<9x400xf32>, vector<9x400xf32>, vector<1x400xf32> -> vector<19x400xf32>
    %cst_18 = arith.constant dense<0.000000e+00> : vector<9x400xf32>
    %39 = tpu.matmul %25, %38, %cst_18 {dimension_numbers = #tpu.dot_dimension_numbers<[1], [0], [0], [1], [0, 0, 1, 1], [], []>} : vector<9x19xf32>, vector<19x400xf32>, vector<9x400xf32> -> vector<9x400xf32>
    %cst_19 = arith.constant 0.000000e+00 : f32
    %40 = vector.broadcast %cst_19 : f32 to vector<9x400xf32>
    %41 = arith.maximumf %39, %40 : vector<9x400xf32>
    %42 = arith.addf %41, %34 : vector<9x400xf32>
    %cst_20 = arith.constant 0.000000e+00 : f32
    %43 = vector.broadcast %cst_20 : f32 to vector<9x400xf32>
    %44 = arith.maximumf %42, %43 : vector<9x400xf32>
    %c81 = arith.constant 81 : index
    %c0_21 = arith.constant 0 : index
    %45 = vector.load %arg2[%c81, %c0_21] : memref<128x128xf32, #tpu.memory_space<vmem>>, vector<10x19xf32>
    %c91 = arith.constant 91 : index
    %c0_22 = arith.constant 0 : index
    %46 = vector.load %arg2[%c91, %c0_22] : memref<128x128xf32, #tpu.memory_space<vmem>>, vector<5x11xf32>
    %cst_23 = arith.constant 0.000000e+00 : f32
    %47 = vector.broadcast %cst_23 : f32 to vector<9x32xf32>
    %48 = vector.extract_strided_slice %44 {offsets = [0, 0], sizes = [9, 368], strides = [1, 1]} : vector<9x400xf32> to vector<9x368xf32>
    %49 = tpu.concatenate %47, %48 in 1 : vector<9x32xf32>, vector<9x368xf32> -> vector<9x400xf32>
    %50 = tpu.concatenate %49, %44, %0 in 0 : vector<9x400xf32>, vector<9x400xf32>, vector<1x400xf32> -> vector<19x400xf32>
    %cst_24 = arith.constant dense<0.000000e+00> : vector<10x400xf32>
    %51 = tpu.matmul %45, %50, %cst_24 {dimension_numbers = #tpu.dot_dimension_numbers<[1], [0], [0], [1], [0, 0, 1, 1], [], []>} : vector<10x19xf32>, vector<19x400xf32>, vector<10x400xf32> -> vector<10x400xf32>
    %52 = vector.extract_strided_slice %51 {offsets = [0, 0], sizes = [5, 400], strides = [1, 1]} : vector<10x400xf32> to vector<5x400xf32>
    %cst_25 = arith.constant 0.000000e+00 : f32
    %53 = vector.broadcast %cst_25 : f32 to vector<5x400xf32>
    %54 = arith.maximumf %52, %53 : vector<5x400xf32>
    %55 = vector.extract_strided_slice %51 {offsets = [5, 0], sizes = [5, 400], strides = [1, 1]} : vector<10x400xf32> to vector<5x400xf32>
    %cst_26 = arith.constant 0.000000e+00 : f32
    %56 = vector.broadcast %cst_26 : f32 to vector<5x32xf32>
    %57 = vector.extract_strided_slice %54 {offsets = [0, 0], sizes = [5, 368], strides = [1, 1]} : vector<5x400xf32> to vector<5x368xf32>
    %58 = tpu.concatenate %56, %57 in 1 : vector<5x32xf32>, vector<5x368xf32> -> vector<5x400xf32>
    %59 = tpu.concatenate %58, %54, %0 in 0 : vector<5x400xf32>, vector<5x400xf32>, vector<1x400xf32> -> vector<11x400xf32>
    %cst_27 = arith.constant dense<0.000000e+00> : vector<5x400xf32>
    %60 = tpu.matmul %46, %59, %cst_27 {dimension_numbers = #tpu.dot_dimension_numbers<[1], [0], [0], [1], [0, 0, 1, 1], [], []>} : vector<5x11xf32>, vector<11x400xf32>, vector<5x400xf32> -> vector<5x400xf32>
    %cst_28 = arith.constant 0.000000e+00 : f32
    %61 = vector.broadcast %cst_28 : f32 to vector<5x400xf32>
    %62 = arith.maximumf %60, %61 : vector<5x400xf32>
    %63 = arith.addf %62, %55 : vector<5x400xf32>
    %cst_29 = arith.constant 0.000000e+00 : f32
    %64 = vector.broadcast %cst_29 : f32 to vector<5x400xf32>
    %65 = arith.maximumf %63, %64 : vector<5x400xf32>
    %c96 = arith.constant 96 : index
    %c0_30 = arith.constant 0 : index
    %66 = vector.load %arg2[%c96, %c0_30] : memref<128x128xf32, #tpu.memory_space<vmem>>, vector<2x11xf32>
    %c98 = arith.constant 98 : index
    %c0_31 = arith.constant 0 : index
    %67 = vector.load %arg2[%c98, %c0_31] : memref<128x128xf32, #tpu.memory_space<vmem>>, vector<1x3xf32>
    %cst_32 = arith.constant 0.000000e+00 : f32
    %68 = vector.broadcast %cst_32 : f32 to vector<5x64xf32>
    %69 = vector.extract_strided_slice %65 {offsets = [0, 0], sizes = [5, 336], strides = [1, 1]} : vector<5x400xf32> to vector<5x336xf32>
    %70 = tpu.concatenate %68, %69 in 1 : vector<5x64xf32>, vector<5x336xf32> -> vector<5x400xf32>
    %71 = tpu.concatenate %70, %65, %0 in 0 : vector<5x400xf32>, vector<5x400xf32>, vector<1x400xf32> -> vector<11x400xf32>
    %cst_33 = arith.constant dense<0.000000e+00> : vector<2x400xf32>
    %72 = tpu.matmul %66, %71, %cst_33 {dimension_numbers = #tpu.dot_dimension_numbers<[1], [0], [0], [1], [0, 0, 1, 1], [], []>} : vector<2x11xf32>, vector<11x400xf32>, vector<2x400xf32> -> vector<2x400xf32>
    %73 = vector.extract_strided_slice %72 {offsets = [0, 0], sizes = [1, 400], strides = [1, 1]} : vector<2x400xf32> to vector<1x400xf32>
    %cst_34 = arith.constant 0.000000e+00 : f32
    %74 = vector.broadcast %cst_34 : f32 to vector<1x400xf32>
    %75 = arith.maximumf %73, %74 : vector<1x400xf32>
    %76 = vector.extract_strided_slice %72 {offsets = [1, 0], sizes = [1, 400], strides = [1, 1]} : vector<2x400xf32> to vector<1x400xf32>
    %cst_35 = arith.constant 0.000000e+00 : f32
    %77 = vector.broadcast %cst_35 : f32 to vector<1x64xf32>
    %78 = vector.extract_strided_slice %75 {offsets = [0, 0], sizes = [1, 336], strides = [1, 1]} : vector<1x400xf32> to vector<1x336xf32>
    %79 = tpu.concatenate %77, %78 in 1 : vector<1x64xf32>, vector<1x336xf32> -> vector<1x400xf32>
    %80 = tpu.concatenate %79, %75, %0 in 0 : vector<1x400xf32>, vector<1x400xf32>, vector<1x400xf32> -> vector<3x400xf32>
    %cst_36 = arith.constant dense<0.000000e+00> : vector<1x400xf32>
    %81 = tpu.matmul %67, %80, %cst_36 {dimension_numbers = #tpu.dot_dimension_numbers<[1], [0], [0], [1], [0, 0, 1, 1], [], []>} : vector<1x3xf32>, vector<3x400xf32>, vector<1x400xf32> -> vector<1x400xf32>
    %cst_37 = arith.constant 0.000000e+00 : f32
    %82 = vector.broadcast %cst_37 : f32 to vector<1x400xf32>
    %83 = arith.maximumf %81, %82 : vector<1x400xf32>
    %84 = arith.addf %83, %76 : vector<1x400xf32>
    %cst_38 = arith.constant 0.000000e+00 : f32
    %85 = vector.broadcast %cst_38 : f32 to vector<1x400xf32>
    %86 = arith.maximumf %84, %85 : vector<1x400xf32>
    %87 = vector.extract_strided_slice %86 {offsets = [0, 0], sizes = [1, 8], strides = [1, 1]} : vector<1x400xf32> to vector<1x8xf32>
    %88 = vector.extract_strided_slice %86 {offsets = [0, 8], sizes = [1, 8], strides = [1, 1]} : vector<1x400xf32> to vector<1x8xf32>
    %89 = vector.extract_strided_slice %86 {offsets = [0, 16], sizes = [1, 8], strides = [1, 1]} : vector<1x400xf32> to vector<1x8xf32>
    %90 = vector.extract_strided_slice %86 {offsets = [0, 24], sizes = [1, 8], strides = [1, 1]} : vector<1x400xf32> to vector<1x8xf32>
    %91 = vector.extract_strided_slice %86 {offsets = [0, 32], sizes = [1, 8], strides = [1, 1]} : vector<1x400xf32> to vector<1x8xf32>
    %92 = vector.extract_strided_slice %86 {offsets = [0, 40], sizes = [1, 8], strides = [1, 1]} : vector<1x400xf32> to vector<1x8xf32>
    %93 = vector.extract_strided_slice %86 {offsets = [0, 48], sizes = [1, 8], strides = [1, 1]} : vector<1x400xf32> to vector<1x8xf32>
    %94 = vector.extract_strided_slice %86 {offsets = [0, 56], sizes = [1, 8], strides = [1, 1]} : vector<1x400xf32> to vector<1x8xf32>
    %95 = vector.extract_strided_slice %86 {offsets = [0, 64], sizes = [1, 8], strides = [1, 1]} : vector<1x400xf32> to vector<1x8xf32>
    %96 = vector.extract_strided_slice %86 {offsets = [0, 72], sizes = [1, 8], strides = [1, 1]} : vector<1x400xf32> to vector<1x8xf32>
    %97 = vector.extract_strided_slice %86 {offsets = [0, 80], sizes = [1, 8], strides = [1, 1]} : vector<1x400xf32> to vector<1x8xf32>
    %98 = vector.extract_strided_slice %86 {offsets = [0, 88], sizes = [1, 8], strides = [1, 1]} : vector<1x400xf32> to vector<1x8xf32>
    %99 = vector.extract_strided_slice %86 {offsets = [0, 96], sizes = [1, 8], strides = [1, 1]} : vector<1x400xf32> to vector<1x8xf32>
    %100 = vector.extract_strided_slice %86 {offsets = [0, 104], sizes = [1, 8], strides = [1, 1]} : vector<1x400xf32> to vector<1x8xf32>
    %101 = vector.extract_strided_slice %86 {offsets = [0, 112], sizes = [1, 8], strides = [1, 1]} : vector<1x400xf32> to vector<1x8xf32>
    %102 = vector.extract_strided_slice %86 {offsets = [0, 120], sizes = [1, 8], strides = [1, 1]} : vector<1x400xf32> to vector<1x8xf32>
    %103 = vector.extract_strided_slice %86 {offsets = [0, 128], sizes = [1, 8], strides = [1, 1]} : vector<1x400xf32> to vector<1x8xf32>
    %104 = vector.extract_strided_slice %86 {offsets = [0, 136], sizes = [1, 8], strides = [1, 1]} : vector<1x400xf32> to vector<1x8xf32>
    %105 = vector.extract_strided_slice %86 {offsets = [0, 144], sizes = [1, 8], strides = [1, 1]} : vector<1x400xf32> to vector<1x8xf32>
    %106 = vector.extract_strided_slice %86 {offsets = [0, 152], sizes = [1, 8], strides = [1, 1]} : vector<1x400xf32> to vector<1x8xf32>
    %107 = vector.extract_strided_slice %86 {offsets = [0, 160], sizes = [1, 8], strides = [1, 1]} : vector<1x400xf32> to vector<1x8xf32>
    %108 = vector.extract_strided_slice %86 {offsets = [0, 168], sizes = [1, 8], strides = [1, 1]} : vector<1x400xf32> to vector<1x8xf32>
    %109 = vector.extract_strided_slice %86 {offsets = [0, 176], sizes = [1, 8], strides = [1, 1]} : vector<1x400xf32> to vector<1x8xf32>
    %110 = vector.extract_strided_slice %86 {offsets = [0, 184], sizes = [1, 8], strides = [1, 1]} : vector<1x400xf32> to vector<1x8xf32>
    %111 = vector.extract_strided_slice %86 {offsets = [0, 192], sizes = [1, 8], strides = [1, 1]} : vector<1x400xf32> to vector<1x8xf32>
    %112 = vector.extract_strided_slice %86 {offsets = [0, 200], sizes = [1, 8], strides = [1, 1]} : vector<1x400xf32> to vector<1x8xf32>
    %113 = vector.extract_strided_slice %86 {offsets = [0, 208], sizes = [1, 8], strides = [1, 1]} : vector<1x400xf32> to vector<1x8xf32>
    %114 = vector.extract_strided_slice %86 {offsets = [0, 216], sizes = [1, 8], strides = [1, 1]} : vector<1x400xf32> to vector<1x8xf32>
    %115 = vector.extract_strided_slice %86 {offsets = [0, 224], sizes = [1, 8], strides = [1, 1]} : vector<1x400xf32> to vector<1x8xf32>
    %116 = vector.extract_strided_slice %86 {offsets = [0, 232], sizes = [1, 8], strides = [1, 1]} : vector<1x400xf32> to vector<1x8xf32>
    %117 = vector.extract_strided_slice %86 {offsets = [0, 240], sizes = [1, 8], strides = [1, 1]} : vector<1x400xf32> to vector<1x8xf32>
    %118 = vector.extract_strided_slice %86 {offsets = [0, 248], sizes = [1, 8], strides = [1, 1]} : vector<1x400xf32> to vector<1x8xf32>
    %119 = vector.extract_strided_slice %86 {offsets = [0, 256], sizes = [1, 8], strides = [1, 1]} : vector<1x400xf32> to vector<1x8xf32>
    %120 = vector.extract_strided_slice %86 {offsets = [0, 264], sizes = [1, 8], strides = [1, 1]} : vector<1x400xf32> to vector<1x8xf32>
    %121 = vector.extract_strided_slice %86 {offsets = [0, 272], sizes = [1, 8], strides = [1, 1]} : vector<1x400xf32> to vector<1x8xf32>
    %122 = vector.extract_strided_slice %86 {offsets = [0, 280], sizes = [1, 8], strides = [1, 1]} : vector<1x400xf32> to vector<1x8xf32>
    %123 = vector.extract_strided_slice %86 {offsets = [0, 288], sizes = [1, 8], strides = [1, 1]} : vector<1x400xf32> to vector<1x8xf32>
    %124 = vector.extract_strided_slice %86 {offsets = [0, 296], sizes = [1, 8], strides = [1, 1]} : vector<1x400xf32> to vector<1x8xf32>
    %125 = vector.extract_strided_slice %86 {offsets = [0, 304], sizes = [1, 8], strides = [1, 1]} : vector<1x400xf32> to vector<1x8xf32>
    %126 = vector.extract_strided_slice %86 {offsets = [0, 312], sizes = [1, 8], strides = [1, 1]} : vector<1x400xf32> to vector<1x8xf32>
    %127 = vector.extract_strided_slice %86 {offsets = [0, 320], sizes = [1, 8], strides = [1, 1]} : vector<1x400xf32> to vector<1x8xf32>
    %128 = vector.extract_strided_slice %86 {offsets = [0, 328], sizes = [1, 8], strides = [1, 1]} : vector<1x400xf32> to vector<1x8xf32>
    %129 = vector.extract_strided_slice %86 {offsets = [0, 336], sizes = [1, 8], strides = [1, 1]} : vector<1x400xf32> to vector<1x8xf32>
    %130 = vector.extract_strided_slice %86 {offsets = [0, 344], sizes = [1, 8], strides = [1, 1]} : vector<1x400xf32> to vector<1x8xf32>
    %131 = vector.extract_strided_slice %86 {offsets = [0, 352], sizes = [1, 8], strides = [1, 1]} : vector<1x400xf32> to vector<1x8xf32>
    %132 = vector.extract_strided_slice %86 {offsets = [0, 360], sizes = [1, 8], strides = [1, 1]} : vector<1x400xf32> to vector<1x8xf32>
    %133 = vector.extract_strided_slice %86 {offsets = [0, 368], sizes = [1, 8], strides = [1, 1]} : vector<1x400xf32> to vector<1x8xf32>
    %134 = vector.extract_strided_slice %86 {offsets = [0, 376], sizes = [1, 8], strides = [1, 1]} : vector<1x400xf32> to vector<1x8xf32>
    %135 = vector.extract_strided_slice %86 {offsets = [0, 384], sizes = [1, 8], strides = [1, 1]} : vector<1x400xf32> to vector<1x8xf32>
    %136 = vector.extract_strided_slice %86 {offsets = [0, 392], sizes = [1, 8], strides = [1, 1]} : vector<1x400xf32> to vector<1x8xf32>
    %137 = vector.extract_strided_slice %0 {offsets = [0, 0], sizes = [1, 8], strides = [1, 1]} : vector<1x400xf32> to vector<1x8xf32>
    %138 = tpu.concatenate %87, %88, %89, %90, %91, %92, %93, %94, %95, %96, %97, %98, %99, %100, %101, %102 in 0 : vector<1x8xf32>, vector<1x8xf32>, vector<1x8xf32>, vector<1x8xf32>, vector<1x8xf32>, vector<1x8xf32>, vector<1x8xf32>, vector<1x8xf32>, vector<1x8xf32>, vector<1x8xf32>, vector<1x8xf32>, vector<1x8xf32>, vector<1x8xf32>, vector<1x8xf32>, vector<1x8xf32>, vector<1x8xf32> -> vector<16x8xf32>
    %139 = tpu.concatenate %103, %104, %105, %106, %107, %108, %109, %110, %111, %112, %113, %114, %115, %116, %117, %118 in 0 : vector<1x8xf32>, vector<1x8xf32>, vector<1x8xf32>, vector<1x8xf32>, vector<1x8xf32>, vector<1x8xf32>, vector<1x8xf32>, vector<1x8xf32>, vector<1x8xf32>, vector<1x8xf32>, vector<1x8xf32>, vector<1x8xf32>, vector<1x8xf32>, vector<1x8xf32>, vector<1x8xf32>, vector<1x8xf32> -> vector<16x8xf32>
    %140 = tpu.concatenate %119, %120, %121, %122, %123, %124, %125, %126, %127, %128, %129, %130, %131, %132, %133, %134 in 0 : vector<1x8xf32>, vector<1x8xf32>, vector<1x8xf32>, vector<1x8xf32>, vector<1x8xf32>, vector<1x8xf32>, vector<1x8xf32>, vector<1x8xf32>, vector<1x8xf32>, vector<1x8xf32>, vector<1x8xf32>, vector<1x8xf32>, vector<1x8xf32>, vector<1x8xf32>, vector<1x8xf32>, vector<1x8xf32> -> vector<16x8xf32>
    %141 = tpu.concatenate %135, %136, %137 in 0 : vector<1x8xf32>, vector<1x8xf32>, vector<1x8xf32> -> vector<3x8xf32>
    %142 = tpu.concatenate %138, %139, %140, %141 in 0 : vector<16x8xf32>, vector<16x8xf32>, vector<16x8xf32>, vector<3x8xf32> -> vector<51x8xf32>
    %c99 = arith.constant 99 : index
    %c0_39 = arith.constant 0 : index
    %143 = vector.load %arg2[%c99, %c0_39] : memref<128x128xf32, #tpu.memory_space<vmem>>, vector<20x51xf32>
    %cst_40 = arith.constant dense<0.000000e+00> : vector<20x8xf32>
    %144 = tpu.matmul %143, %142, %cst_40 {dimension_numbers = #tpu.dot_dimension_numbers<[1], [0], [0], [1], [0, 0, 1, 1], [], []>} : vector<20x51xf32>, vector<51x8xf32>, vector<20x8xf32> -> vector<20x8xf32>
    %cst_41 = arith.constant 0.000000e+00 : f32
    %cst_42 = arith.constant 6.000000e+00 : f32
    %145 = vector.broadcast %cst_41 : f32 to vector<20x8xf32>
    %146 = arith.maximumf %145, %144 : vector<20x8xf32>
    %147 = vector.broadcast %cst_42 : f32 to vector<20x8xf32>
    %148 = arith.minimumf %147, %146 : vector<20x8xf32>
    %c119 = arith.constant 119 : index
    %c0_43 = arith.constant 0 : index
    %149 = vector.load %arg2[%c119, %c0_43] : memref<128x128xf32, #tpu.memory_space<vmem>>, vector<2x20xf32>
    %c119_44 = arith.constant 119 : index
    %c20 = arith.constant 20 : index
    %150 = vector.load %arg2[%c119_44, %c20] : memref<128x128xf32, #tpu.memory_space<vmem>>, vector<2x1xf32>
    %cst_45 = arith.constant dense<0.000000e+00> : vector<2x8xf32>
    %151 = tpu.matmul %149, %148, %cst_45 {dimension_numbers = #tpu.dot_dimension_numbers<[1], [0], [0], [1], [0, 0, 1, 1], [], []>} : vector<2x20xf32>, vector<20x8xf32>, vector<2x8xf32> -> vector<2x8xf32>
    %152 = vector.broadcast %150 : vector<2x1xf32> to vector<2x8xf32>
    %153 = arith.addf %151, %152 : vector<2x8xf32>
    %cst_46 = arith.constant dense<0xFF800000> : vector<8xf32>
    %154 = vector.multi_reduction <maximumf>, %153, %cst_46 [0] : vector<2x8xf32> to vector<8xf32>
    %155 = vector.shape_cast %154 : vector<8xf32> to vector<1x8xf32>
    %156 = vector.broadcast %155 : vector<1x8xf32> to vector<2x8xf32>
    %157 = arith.subf %153, %156 : vector<2x8xf32>
    %158 = math.exp %157 : vector<2x8xf32>
    %cst_47 = arith.constant dense<0.000000e+00> : vector<8xf32>
    %159 = vector.multi_reduction <add>, %158, %cst_47 [0] : vector<2x8xf32> to vector<8xf32>
    %160 = vector.shape_cast %159 : vector<8xf32> to vector<1x8xf32>
    %161 = vector.broadcast %160 : vector<1x8xf32> to vector<2x8xf32>
    %162 = arith.divf %158, %161 : vector<2x8xf32>
    %c0_48 = arith.constant 0 : index
    %c0_49 = arith.constant 0 : index
    %c0_50 = arith.constant 0 : index
    %163 = vector.load %arg3[%c0_48, %c0_49, %c0_50] : memref<1x2x8xf32, #tpu.memory_space<vmem>>, vector<1x2x8xf32>
    %164 = vector.shape_cast %163 : vector<1x2x8xf32> to vector<2x8xf32>
    %165 = vector.shape_cast %162 : vector<2x8xf32> to vector<1x2x8xf32>
    tpu.vector_store %arg3[%c0_48, %c0_49, %c0_50], %165 {strides = array<i32>} : memref<1x2x8xf32, #tpu.memory_space<vmem>>, vector<1x2x8xf32>,
    return
  }
  func.func @transform_0(%arg0: i32) -> (i32, i32, i32) {
    %c0_i32 = arith.constant 0 : i32
    %c0_i32_0 = arith.constant 0 : i32
    %c0_i32_1 = arith.constant 0 : i32
    return %arg0, %c0_i32, %c0_i32_0 : i32, i32, i32
  }
  func.func @transform_1(%arg0: i32) -> (i32, i32) {
    %c0_i32 = arith.constant 0 : i32
    %c0_i32_0 = arith.constant 0 : i32
    %c0_i32_1 = arith.constant 0 : i32
    return %c0_i32, %c0_i32_0 : i32, i32
  }
  func.func @transform_2(%arg0: i32) -> (i32, i32, i32) {
    %c0_i32 = arith.constant 0 : i32
    %c0_i32_0 = arith.constant 0 : i32
    %c0_i32_1 = arith.constant 0 : i32
    return %arg0, %c0_i32, %c0_i32_0 : i32, i32, i32
  }
}

</mosaic_0001>

<llo_original>
// kernel: tpu_custom_call.1
$region0: #{tpu_custom_call.1}
  #allocation0 [shape = 'u32[]', space=smem, size = 0x4, offset = 0x4, fixed_abs, tag = 'smem constant byte address 0x4 - core index']
  #allocation1 [shape = 'u32[144,128]{1,0:T(1,128)}', space=vmem, size = 0x12000, scoped, tag = 'internal scratch']
  %s0 = inlined_call_operand.hbm [shape: f32[1,4,400], index: 0, kind: input, shape index: {}]
  %s1 = inlined_call_operand.hbm [shape: f32[128,128], index: 1, kind: input, shape index: {}]
  %s2 = inlined_call_operand.hbm [shape: f32[1,2,8], index: 2, kind: output, shape index: {}]
  %s3 = sld [smem:[#allocation0]]
  $region26: #{tpu_custom_call.1} parent=0
    _
  %s5 = ssub.s32 1, %s3
  %s6 = scalar_select 0, %s5, %s3
  $region1: #{tpu_custom_call.1} parent=0
    #allocation2 [shape = 'u8[8192]{0}', space=vmem, size = 0x2000, scoped, tag = 'input window, operand 0, single buffered']
    #allocation3 [shape = 's32[1]{0}', space=sflag, size = 0x4, scoped, tag = 'scoped memory for tpu_custom_call.1']
    #allocation4 [shape = 's32[1]{0}', space=sflag, size = 0x4, scoped, tag = 'scoped memory for tpu_custom_call.1']
    #allocation5 [shape = 'u8[65536]{0}', space=vmem, size = 0x10000, scoped, tag = 'input window, operand 1, single buffered']
    #allocation6 [shape = 's32[1]{0}', space=sflag, size = 0x4, scoped, tag = 'scoped memory for tpu_custom_call.1']
    #allocation7 [shape = 'u8[1024]{0}', space=vmem, size = 0x400, scoped, tag = 'output window, operand 0, single buffered']
    %7 = vsyncpa [#allocation3], 0
    %8 = vsyncpa [#allocation6], 0
    %9 = vsyncpa [#allocation4], 0
    // Predicated region
    $region2: #{tpu_custom_call.1} parent=1 // pred_check
      _
    $region3: #{tpu_custom_call.1} parent=1 // pred_check_branch
      %11 = sbr.rel (0) target = $region5
    $region4: #{tpu_custom_call.1} parent=1 // pred_region
      %s13 = ssub.s32 256, 256
      %14 = vsyncadd [#allocation3], %s13
      %s16 = sshll.u32 [#allocation2], 4
      %s17 = int_to_ptr.vmem [resolvable:$true] %s16
      %19 = dma.hbm_to_vmem [thread:$0]  %s0, 256, %s17, [#allocation3]
    $region5: #{tpu_custom_call.1} parent=1 // pred_fallthru
      _
    // Predicated region
    $region6: #{tpu_custom_call.1} parent=1 // pred_check
      _
    $region7: #{tpu_custom_call.1} parent=1 // pred_check_branch
      %21 = sbr.rel (0) target = $region9
    $region8: #{tpu_custom_call.1} parent=1 // pred_region
      %s23 = ssub.s32 2048, 2048
      %24 = vsyncadd [#allocation6], %s23
      %s25 = sshll.u32 [#allocation5], 4
      %s26 = int_to_ptr.vmem [resolvable:$true] %s25
      %31 = dma.hbm_to_vmem [thread:$0]  %s1, 2048, %s26, [#allocation6], 128, 128, 8
    $region9: #{tpu_custom_call.1} parent=1 // pred_fallthru
      _
    // Predicated region
    $region10: #{tpu_custom_call.1} parent=1 // pred_check
      _
    $region11: #{tpu_custom_call.1} parent=1 // pred_check_branch
      %33 = sbr.rel (0) target = $region13
    $region12: #{tpu_custom_call.1} parent=1 // pred_region
      %34 = dma.done [#allocation3], 256
    $region13: #{tpu_custom_call.1} parent=1 // pred_fallthru
      _
    // Predicated region
    $region14: #{tpu_custom_call.1} parent=1 // pred_check
      _
    $region15: #{tpu_custom_call.1} parent=1 // pred_check_branch
      %36 = sbr.rel (0) target = $region17
    $region16: #{tpu_custom_call.1} parent=1 // pred_region
      %37 = dma.done [#allocation6], 2048
    $region17: #{tpu_custom_call.1} parent=1 // pred_fallthru
      _
    %v38 = vld [vmem:[#allocation2] sm:$0xff]
    %v39 = vld [vmem:[#allocation2 + $0x8] sm:$0xff]
    %v40 = vld [vmem:[#allocation5] sm:$0xff]
    %v41 = vld [vmem:[#allocation5 + $0x8] sm:$0xff]
    %v42 = vld [vmem:[#allocation5 + $0x10] sm:$0xff]
    %v43 = vld [vmem:[#allocation5 + $0x18] sm:$0xff]
    %v44 = vld [vmem:[#allocation5 + $0x20] sm:$0xf]
    %v45 = vld [vmem:[#allocation5 + $0x24] sm:$0xff]
    %v46 = vld [vmem:[#allocation5 + $0x2c] sm:$0xff]
    %v47 = vld [vmem:[#allocation5 + $0x34] sm:$0x3]
    %v50 = vcombine.high %v38, %v38
    %v51 = vcombine.high %v39, %v39
    %52 = vrot.lane.b32.xlu0 %v38, 8
    %v53 = vpop.permute.xlu0 %52
    %54 = vrot.lane.b32.xlu0 %v50, 8
    %v55 = vpop.permute.xlu0 %54
    %56 = vrot.lane.b32.xlu0 %v39, 8
    %v57 = vpop.permute.xlu0 %56
    %58 = vrot.lane.b32.xlu0 %v51, 8
    %v59 = vpop.permute.xlu0 %58
    %vm60 = vcmask 64512
    %v61 = vsel %vm60, %v53, %v55
    %v62 = vsel %vm60, %v55, %v57
    %v63 = vsel %vm60, %v57, %v59
    %v68 = vsel %vm60, 0.0, %v53
    %v69 = vcombine.low %v38, %v38
    %v70 = vcombine.low %v39, %v39
    %vm73 = vcmask 1043456
    %v74 = vsel %vm73, %v68, %v69
    %v75 = vsel %vm73, %v61, %v38
    %v76 = vsel %vm73, %v62, %v70
    %v77 = vsel %vm73, %v63, %v39
    %vm78 = vcmask 72704
    %v80 = vsel %vm78, %v40, 0
    %v83 = vsel %vm78, %v41, 0
    %v86 = vsel %vm78, %v42, 0
    %v89 = vsel %vm78, %v43, 0
    %v92 = vsel %vm78, %v44, 0
    %vm94 = vcmask 1040384
    %v96 = vsel %vm94, 1.0, 0
    %98 = vmatprep.subr.mxu0 %v75
    %99 = vmatpush1.msra.mxu0 %v74
    %100 = vmatprep.subr.mxu0 %v96
    %101 = vmatpush1.msra.mxu0 %v96
    %102 = vmatprep.subr.mxu0 0.0
    %103 = vmatpush1.msra.mxu0 0.0
    %104 = vmatprep.subr.mxu0 0.0
    %105 = vmatpush1.msra.mxu0 0.0
    %106 = vmatprep.subr.mxu0 0.0
    %107 = vmatpush1.msra.mxu0 0.0
    %108 = vmatprep.subr.mxu0 0.0
    %109 = vmatpush1.msra.mxu0 0.0
    %110 = vmatprep.subr.mxu0 0.0
    %111 = vmatpush1.msra.mxu0 0.0
    %112 = vmatprep.subr.mxu0 0.0
    %113 = vmatpush1.msra.mxu0 0.0
    %114 = vmatprep.subr.mxu0 0.0
    %115 = vmatpush1.msra.mxu0 0.0
    %116 = vmatprep.subr.mxu0 0.0
    %117 = vmatpush1.msra.mxu0 0.0
    %118 = vmatprep.subr.mxu0 0.0
    %119 = vmatpush1.msra.mxu0 0.0
    %120 = vmatprep.subr.mxu0 0.0
    %121 = vmatpush1.msra.mxu0 0.0
    %122 = vmatprep.subr.mxu0 0.0
    %123 = vmatpush1.msra.mxu0 0.0
    %124 = vmatprep.subr.mxu0 0.0
    %125 = vmatpush1.msra.mxu0 0.0
    %126 = vmatprep.subr.mxu0 0.0
    %127 = vmatpush1.msra.mxu0 0.0
    %128 = vmatprep.subr.mxu0 0.0
    %129 = vmatpush1.msra.mxu0 0.0
    %130 = vmatprep.subr.mxu0 0.0
    %131 = vmatpush1.msra.mxu0 0.0
    %132 = vmatprep.subr.mxu0 0.0
    %133 = vmatpush1.msra.mxu0 0.0
    %134 = vmatprep.subr.mxu0 0.0
    %135 = vmatpush1.msra.mxu0 0.0
    %136 = vmatprep.subr.mxu0 0.0
    %137 = vmatpush1.msra.mxu0 0.0
    %138 = vmatprep.subr.mxu0 0.0
    %139 = vmatpush1.msra.mxu0 0.0
    %140 = vmatprep.subr.mxu0 0.0
    %141 = vmatpush1.msra.mxu0 0.0
    %142 = vmatprep.subr.mxu0 0.0
    %143 = vmatpush1.msra.mxu0 0.0
    %144 = vmatprep.subr.mxu0 0.0
    %145 = vmatpush1.msra.mxu0 0.0
    %146 = vmatprep.subr.mxu0 0.0
    %147 = vmatpush1.msra.mxu0 0.0
    %148 = vmatprep.subr.mxu0 0.0
    %149 = vmatpush1.msra.mxu0 0.0
    %150 = vmatprep.subr.mxu0 0.0
    %151 = vmatpush1.msra.mxu0 0.0
    %152 = vmatprep.subr.mxu0 0.0
    %153 = vmatpush1.msra.mxu0 0.0
    %154 = vmatprep.subr.mxu0 0.0
    %155 = vmatpush1.msra.mxu0 0.0
    %156 = vmatprep.subr.mxu0 0.0
    %157 = vmatpush1.msra.mxu0 0.0
    %158 = vmatprep.subr.mxu0 0.0
    %159 = vmatpush1.msra.mxu0 0.0
    %160 = vmatprep.subr.mxu0 0.0
    %161 = vmatpush1.msra.mxu0 0.0
    %162 = vmatprep.mubr.f32.mxu0 0.0
    %163 = vmatmul.mubr.f32.gmra.mrb[0].mxu0 %v80
    %v164 = vpop.f32.mrb[0].mxu0
    %v165 = vadd.f32 0.0, %v164
    %v166 = vpop.f32.mrb[0].mxu0
    %v167 = vadd.f32 0.0, %v166
    %168 = vmatprep.mubr.f32.mxu0 0.0
    %169 = vmatmul.mubr.f32.gmra.mrb[0].mxu0 %v83
    %v170 = vpop.f32.mrb[0].mxu0
    %v171 = vadd.f32 0.0, %v170
    %v172 = vpop.f32.mrb[0].mxu0
    %v173 = vadd.f32 0.0, %v172
    %174 = vmatprep.mubr.f32.mxu0 0.0
    %175 = vmatmul.mubr.f32.gmra.mrb[0].mxu0 %v86
    %v176 = vpop.f32.mrb[0].mxu0
    %v177 = vadd.f32 0.0, %v176
    %v178 = vpop.f32.mrb[0].mxu0
    %v179 = vadd.f32 0.0, %v178
    %180 = vmatprep.mubr.f32.mxu0 0.0
    %181 = vmatmul.mubr.f32.gmra.mrb[0].mxu0 %v89
    %v182 = vpop.f32.mrb[0].mxu0
    %v183 = vadd.f32 0.0, %v182
    %v184 = vpop.f32.mrb[0].mxu0
    %v185 = vadd.f32 0.0, %v184
    %186 = vmatprep.mubr.f32.mxu0 0.0
    %187 = vmatmul.mubr.f32.gmra.mrb[0].mxu0 %v92
    %v188 = vpop.f32.mrb[0].mxu0
    %v189 = vadd.f32 0.0, %v188
    %v190 = vpop.f32.mrb[0].mxu0
    %v191 = vadd.f32 0.0, %v190
    %192 = vdwg.mxu0
    %193 = vmatprep.subr.mxu0 %v77
    %194 = vmatpush1.msra.mxu0 %v76
    %195 = vmatprep.subr.mxu0 %v96
    %196 = vmatpush1.msra.mxu0 %v96
    %197 = vmatprep.subr.mxu0 0.0
    %198 = vmatpush1.msra.mxu0 0.0
    %199 = vmatprep.subr.mxu0 0.0
    %200 = vmatpush1.msra.mxu0 0.0
    %201 = vmatprep.subr.mxu0 0.0
    %202 = vmatpush1.msra.mxu0 0.0
    %203 = vmatprep.subr.mxu0 0.0
    %204 = vmatpush1.msra.mxu0 0.0
    %205 = vmatprep.subr.mxu0 0.0
    %206 = vmatpush1.msra.mxu0 0.0
    %207 = vmatprep.subr.mxu0 0.0
    %208 = vmatpush1.msra.mxu0 0.0
    %209 = vmatprep.subr.mxu0 0.0
    %210 = vmatpush1.msra.mxu0 0.0
    %211 = vmatprep.subr.mxu0 0.0
    %212 = vmatpush1.msra.mxu0 0.0
    %213 = vmatprep.subr.mxu0 0.0
    %214 = vmatpush1.msra.mxu0 0.0
    %215 = vmatprep.subr.mxu0 0.0
    %216 = vmatpush1.msra.mxu0 0.0
    %217 = vmatprep.subr.mxu0 0.0
    %218 = vmatpush1.msra.mxu0 0.0
    %219 = vmatprep.subr.mxu0 0.0
    %220 = vmatpush1.msra.mxu0 0.0
    %221 = vmatprep.subr.mxu0 0.0
    %222 = vmatpush1.msra.mxu0 0.0
    %223 = vmatprep.subr.mxu0 0.0
    %224 = vmatpush1.msra.mxu0 0.0
    %225 = vmatprep.subr.mxu0 0.0
    %226 = vmatpush1.msra.mxu0 0.0
    %227 = vmatprep.subr.mxu0 0.0
    %228 = vmatpush1.msra.mxu0 0.0
    %229 = vmatprep.subr.mxu0 0.0
    %230 = vmatpush1.msra.mxu0 0.0
    %231 = vmatprep.subr.mxu0 0.0
    %232 = vmatpush1.msra.mxu0 0.0
    %233 = vmatprep.subr.mxu0 0.0
    %234 = vmatpush1.msra.mxu0 0.0
    %235 = vmatprep.subr.mxu0 0.0
    %236 = vmatpush1.msra.mxu0 0.0
    %237 = vmatprep.subr.mxu0 0.0
    %238 = vmatpush1.msra.mxu0 0.0
    %239 = vmatprep.subr.mxu0 0.0
    %240 = vmatpush1.msra.mxu0 0.0
    %241 = vmatprep.subr.mxu0 0.0
    %242 = vmatpush1.msra.mxu0 0.0
    %243 = vmatprep.subr.mxu0 0.0
    %244 = vmatpush1.msra.mxu0 0.0
    %245 = vmatprep.subr.mxu0 0.0
    %246 = vmatpush1.msra.mxu0 0.0
    %247 = vmatprep.subr.mxu0 0.0
    %248 = vmatpush1.msra.mxu0 0.0
    %249 = vmatprep.subr.mxu0 0.0
    %250 = vmatpush1.msra.mxu0 0.0
    %251 = vmatprep.subr.mxu0 0.0
    %252 = vmatpush1.msra.mxu0 0.0
    %253 = vmatprep.subr.mxu0 0.0
    %254 = vmatpush1.msra.mxu0 0.0
    %255 = vmatprep.subr.mxu0 0.0
    %256 = vmatpush1.msra.mxu0 0.0
    %257 = vmatprep.mubr.f32.mxu0 0.0
    %258 = vmatmul.mubr.f32.gmra.mrb[0].mxu0 %v80
    %v259 = vpop.f32.mrb[0].mxu0
    %v260 = vadd.f32 0.0, %v259
    %v261 = vpop.f32.mrb[0].mxu0
    %v262 = vadd.f32 0.0, %v261
    %263 = vmatprep.mubr.f32.mxu0 0.0
    %264 = vmatmul.mubr.f32.gmra.mrb[0].mxu0 %v83
    %v265 = vpop.f32.mrb[0].mxu0
    %v266 = vadd.f32 0.0, %v265
    %v267 = vpop.f32.mrb[0].mxu0
    %v268 = vadd.f32 0.0, %v267
    %269 = vmatprep.mubr.f32.mxu0 0.0
    %270 = vmatmul.mubr.f32.gmra.mrb[0].mxu0 %v86
    %v271 = vpop.f32.mrb[0].mxu0
    %v272 = vadd.f32 0.0, %v271
    %v273 = vpop.f32.mrb[0].mxu0
    %v274 = vadd.f32 0.0, %v273
    %275 = vmatprep.mubr.f32.mxu0 0.0
    %276 = vmatmul.mubr.f32.gmra.mrb[0].mxu0 %v89
    %v277 = vpop.f32.mrb[0].mxu0
    %v278 = vadd.f32 0.0, %v277
    %v279 = vpop.f32.mrb[0].mxu0
    %v280 = vadd.f32 0.0, %v279
    %281 = vmatprep.mubr.f32.mxu0 0.0
    %282 = vmatmul.mubr.f32.gmra.mrb[0].mxu0 %v92
    %v283 = vpop.f32.mrb[0].mxu0
    %v284 = vadd.f32 0.0, %v283
    %v285 = vpop.f32.mrb[0].mxu0
    %v286 = vadd.f32 0.0, %v285
    %287 = vdwg.mxu0
    %v288 = vmax.f32 %v165, 0.0
    %v289 = vmax.f32 %v167, 0.0
    %v290 = vmax.f32 %v260, 0.0
    %v291 = vmax.f32 %v262, 0.0
    %v292 = vmax.f32 %v171, 0.0
    %v293 = vmax.f32 %v173, 0.0
    %v294 = vmax.f32 %v266, 0.0
    %v295 = vmax.f32 %v268, 0.0
    %v296 = vmax.f32 %v177, 0.0
    %v297 = vmax.f32 %v179, 0.0
    %v298 = vmax.f32 %v272, 0.0
    %v299 = vmax.f32 %v274, 0.0
    %312 = vrot.lane.b32.xlu0 %v288, 8
    %v313 = vpop.permute.xlu0 %312
    %314 = vrot.lane.b32.xlu0 %v289, 8
    %v315 = vpop.permute.xlu0 %314
    %316 = vrot.lane.b32.xlu0 %v290, 8
    %v317 = vpop.permute.xlu0 %316
    %318 = vrot.lane.b32.xlu0 %v291, 8
    %v319 = vpop.permute.xlu0 %318
    %320 = vrot.lane.b32.xlu0 %v292, 8
    %v321 = vpop.permute.xlu0 %320
    %322 = vrot.lane.b32.xlu0 %v293, 8
    %v323 = vpop.permute.xlu0 %322
    %324 = vrot.lane.b32.xlu0 %v294, 8
    %v325 = vpop.permute.xlu0 %324
    %326 = vrot.lane.b32.xlu0 %v295, 8
    %v327 = vpop.permute.xlu0 %326
    %328 = vrot.lane.b32.xlu0 %v296, 8
    %v329 = vpop.permute.xlu0 %328
    %330 = vrot.lane.b32.xlu0 %v297, 8
    %v331 = vpop.permute.xlu0 %330
    %332 = vrot.lane.b32.xlu0 %v298, 8
    %v333 = vpop.permute.xlu0 %332
    %334 = vrot.lane.b32.xlu0 %v299, 8
    %v335 = vpop.permute.xlu0 %334
    %v336 = vsel %vm60, %v313, %v315
    %v337 = vsel %vm60, %v315, %v317
    %v338 = vsel %vm60, %v317, %v319
    %v339 = vsel %vm60, %v321, %v323
    %v340 = vsel %vm60, %v323, %v325
    %v341 = vsel %vm60, %v325, %v327
    %v342 = vsel %vm60, %v329, %v331
    %v343 = vsel %vm60, %v331, %v333
    %v344 = vsel %vm60, %v333, %v335
    %v357 = vsel %vm60, 0.0, %v313
    %v358 = vsel %vm60, 0.0, %v321
    %v359 = vsel %vm60, 0.0, %v329
    %vm360 = vcmask 1041408
    %v361 = vrot.slane %v288, 6
    %v362 = vrot.slane %v289, 6
    %v363 = vrot.slane %v290, 6
    %v364 = vrot.slane %v291, 6
    %v365 = vrot.slane %v292, 6
    %v366 = vsel %vm360, %v361, %v365
    %v367 = vrot.slane %v293, 6
    %v368 = vsel %vm360, %v362, %v367
    %v369 = vrot.slane %v294, 6
    %v370 = vsel %vm360, %v363, %v369
    %v371 = vrot.slane %v295, 6
    %v372 = vsel %vm360, %v364, %v371
    %v373 = vrot.slane %v296, 6
    %v374 = vsel %vm360, %v365, %v373
    %v375 = vrot.slane %v297, 6
    %v376 = vsel %vm360, %v367, %v375
    %v377 = vrot.slane %v298, 6
    %v378 = vsel %vm360, %v369, %v377
    %v379 = vrot.slane %v299, 6
    %v380 = vsel %vm360, %v371, %v379
    %v393 = vsel %vm360, %v359, %v361
    %v394 = vsel %vm360, %v342, %v362
    %v395 = vsel %vm360, %v343, %v363
    %v396 = vsel %vm360, %v344, %v364
    %v397 = vsel %vm73, %v374, 1.0
    %v398 = vsel %vm73, %v376, 1.0
    %v399 = vsel %vm73, %v378, 1.0
    %v400 = vsel %vm73, %v380, 1.0
    %vm401 = vcmask 302080
    %v403 = vsel %vm401, %v45, 0
    %v406 = vsel %vm401, %v46, 0
    %v409 = vsel %vm401, %v47, 0
    %vm411 = vcmask 1044480
    %v413 = vsel %vm411, %v397, 0
    %v416 = vsel %vm411, %v398, 0
    %v419 = vsel %vm411, %v399, 0
    %v422 = vsel %vm411, %v400, 0
    %424 = vmatprep.subr.mxu0 %v336
    %425 = vmatpush1.msra.mxu0 %v357
    %426 = vmatprep.subr.mxu0 %v339
    %427 = vmatpush1.msra.mxu0 %v358
    %428 = vmatprep.subr.mxu0 %v394
    %429 = vmatpush1.msra.mxu0 %v393
    %430 = vmatprep.subr.mxu0 %v368
    %431 = vmatpush1.msra.mxu0 %v366
    %432 = vmatprep.subr.mxu0 %v416
    %433 = vmatpush1.msra.mxu0 %v413
    %434 = vmatprep.subr.mxu0 0.0
    %435 = vmatpush1.msra.mxu0 0.0
    %436 = vmatprep.subr.mxu0 0.0
    %437 = vmatpush1.msra.mxu0 0.0
    %438 = vmatprep.subr.mxu0 0.0
    %439 = vmatpush1.msra.mxu0 0.0
    %440 = vmatprep.subr.mxu0 0.0
    %441 = vmatpush1.msra.mxu0 0.0
    %442 = vmatprep.subr.mxu0 0.0
    %443 = vmatpush1.msra.mxu0 0.0
    %444 = vmatprep.subr.mxu0 0.0
    %445 = vmatpush1.msra.mxu0 0.0
    %446 = vmatprep.subr.mxu0 0.0
    %447 = vmatpush1.msra.mxu0 0.0
    %448 = vmatprep.subr.mxu0 0.0
    %449 = vmatpush1.msra.mxu0 0.0
    %450 = vmatprep.subr.mxu0 0.0
    %451 = vmatpush1.msra.mxu0 0.0
    %452 = vmatprep.subr.mxu0 0.0
    %453 = vmatpush1.msra.mxu0 0.0
    %454 = vmatprep.subr.mxu0 0.0
    %455 = vmatpush1.msra.mxu0 0.0
    %456 = vmatprep.subr.mxu0 0.0
    %457 = vmatpush1.msra.mxu0 0.0
    %458 = vmatprep.subr.mxu0 0.0
    %459 = vmatpush1.msra.mxu0 0.0
    %460 = vmatprep.subr.mxu0 0.0
    %461 = vmatpush1.msra.mxu0 0.0
    %462 = vmatprep.subr.mxu0 0.0
    %463 = vmatpush1.msra.mxu0 0.0
    %464 = vmatprep.subr.mxu0 0.0
    %465 = vmatpush1.msra.mxu0 0.0
    %466 = vmatprep.subr.mxu0 0.0
    %467 = vmatpush1.msra.mxu0 0.0
    %468 = vmatprep.subr.mxu0 0.0
    %469 = vmatpush1.msra.mxu0 0.0
    %470 = vmatprep.subr.mxu0 0.0
    %471 = vmatpush1.msra.mxu0 0.0
    %472 = vmatprep.subr.mxu0 0.0
    %473 = vmatpush1.msra.mxu0 0.0
    %474 = vmatprep.subr.mxu0 0.0
    %475 = vmatpush1.msra.mxu0 0.0
    %476 = vmatprep.subr.mxu0 0.0
    %477 = vmatpush1.msra.mxu0 0.0
    %478 = vmatprep.subr.mxu0 0.0
    %479 = vmatpush1.msra.mxu0 0.0
    %480 = vmatprep.subr.mxu0 0.0
    %481 = vmatpush1.msra.mxu0 0.0
    %482 = vmatprep.subr.mxu0 0.0
    %483 = vmatpush1.msra.mxu0 0.0
    %484 = vmatprep.subr.mxu0 0.0
    %485 = vmatpush1.msra.mxu0 0.0
    %486 = vmatprep.subr.mxu0 0.0
    %487 = vmatpush1.msra.mxu0 0.0
    %488 = vmatprep.mubr.f32.mxu0 0.0
    %489 = vmatmul.mubr.f32.gmra.mrb[0].mxu0 %v403
    %v490 = vpop.f32.mrb[0].mxu0
    %v491 = vadd.f32 0.0, %v490
    %v492 = vpop.f32.mrb[0].mxu0
    %v493 = vadd.f32 0.0, %v492
    %494 = vmatprep.mubr.f32.mxu0 0.0
    %495 = vmatmul.mubr.f32.gmra.mrb[0].mxu0 %v406
    %v496 = vpop.f32.mrb[0].mxu0
    %v497 = vadd.f32 0.0, %v496
    %v498 = vpop.f32.mrb[0].mxu0
    %v499 = vadd.f32 0.0, %v498
    %500 = vmatprep.mubr.f32.mxu0 0.0
    %501 = vmatmul.mubr.f32.gmra.mrb[0].mxu0 %v409
    %v502 = vpop.f32.mrb[0].mxu0
    %v503 = vadd.f32 0.0, %v502
    %v504 = vpop.f32.mrb[0].mxu0
    %v505 = vadd.f32 0.0, %v504
    %506 = vdwg.mxu0
    %507 = vmatprep.subr.mxu0 %v338
    %508 = vmatpush1.msra.mxu0 %v337
    %509 = vmatprep.subr.mxu0 %v341
    %510 = vmatpush1.msra.mxu0 %v340
    %511 = vmatprep.subr.mxu0 %v396
    %512 = vmatpush1.msra.mxu0 %v395
    %513 = vmatprep.subr.mxu0 %v372
    %514 = vmatpush1.msra.mxu0 %v370
    %515 = vmatprep.subr.mxu0 %v422
    %516 = vmatpush1.msra.mxu0 %v419
    %517 = vmatprep.subr.mxu0 0.0
    %518 = vmatpush1.msra.mxu0 0.0
    %519 = vmatprep.subr.mxu0 0.0
    %520 = vmatpush1.msra.mxu0 0.0
    %521 = vmatprep.subr.mxu0 0.0
    %522 = vmatpush1.msra.mxu0 0.0
    %523 = vmatprep.subr.mxu0 0.0
    %524 = vmatpush1.msra.mxu0 0.0
    %525 = vmatprep.subr.mxu0 0.0
    %526 = vmatpush1.msra.mxu0 0.0
    %527 = vmatprep.subr.mxu0 0.0
    %528 = vmatpush1.msra.mxu0 0.0
    %529 = vmatprep.subr.mxu0 0.0
    %530 = vmatpush1.msra.mxu0 0.0
    %531 = vmatprep.subr.mxu0 0.0
    %532 = vmatpush1.msra.mxu0 0.0
    %533 = vmatprep.subr.mxu0 0.0
    %534 = vmatpush1.msra.mxu0 0.0
    %535 = vmatprep.subr.mxu0 0.0
    %536 = vmatpush1.msra.mxu0 0.0
    %537 = vmatprep.subr.mxu0 0.0
    %538 = vmatpush1.msra.mxu0 0.0
    %539 = vmatprep.subr.mxu0 0.0
    %540 = vmatpush1.msra.mxu0 0.0
    %541 = vmatprep.subr.mxu0 0.0
    %542 = vmatpush1.msra.mxu0 0.0
    %543 = vmatprep.subr.mxu0 0.0
    %544 = vmatpush1.msra.mxu0 0.0
    %545 = vmatprep.subr.mxu0 0.0
    %546 = vmatpush1.msra.mxu0 0.0
    %547 = vmatprep.subr.mxu0 0.0
    %548 = vmatpush1.msra.mxu0 0.0
    %549 = vmatprep.subr.mxu0 0.0
    %550 = vmatpush1.msra.mxu0 0.0
    %551 = vmatprep.subr.mxu0 0.0
    %552 = vmatpush1.msra.mxu0 0.0
    %553 = vmatprep.subr.mxu0 0.0
    %554 = vmatpush1.msra.mxu0 0.0
    %555 = vmatprep.subr.mxu0 0.0
    %556 = vmatpush1.msra.mxu0 0.0
    %557 = vmatprep.subr.mxu0 0.0
    %558 = vmatpush1.msra.mxu0 0.0
    %559 = vmatprep.subr.mxu0 0.0
    %560 = vmatpush1.msra.mxu0 0.0
    %561 = vmatprep.subr.mxu0 0.0
    %562 = vmatpush1.msra.mxu0 0.0
    %563 = vmatprep.subr.mxu0 0.0
    %564 = vmatpush1.msra.mxu0 0.0
    %565 = vmatprep.subr.mxu0 0.0
    %566 = vmatpush1.msra.mxu0 0.0
    %567 = vmatprep.subr.mxu0 0.0
    %568 = vmatpush1.msra.mxu0 0.0
    %569 = vmatprep.subr.mxu0 0.0
    %570 = vmatpush1.msra.mxu0 0.0
    %571 = vmatprep.mubr.f32.mxu0 0.0
    %572 = vmatmul.mubr.f32.gmra.mrb[0].mxu0 %v403
    %v573 = vpop.f32.mrb[0].mxu0
    %v574 = vadd.f32 0.0, %v573
    %v575 = vpop.f32.mrb[0].mxu0
    %v576 = vadd.f32 0.0, %v575
    %577 = vmatprep.mubr.f32.mxu0 0.0
    %578 = vmatmul.mubr.f32.gmra.mrb[0].mxu0 %v406
    %v579 = vpop.f32.mrb[0].mxu0
    %v580 = vadd.f32 0.0, %v579
    %v581 = vpop.f32.mrb[0].mxu0
    %v582 = vadd.f32 0.0, %v581
    %583 = vmatprep.mubr.f32.mxu0 0.0
    %584 = vmatmul.mubr.f32.gmra.mrb[0].mxu0 %v409
    %v585 = vpop.f32.mrb[0].mxu0
    %v586 = vadd.f32 0.0, %v585
    %v587 = vpop.f32.mrb[0].mxu0
    %v588 = vadd.f32 0.0, %v587
    %589 = vdwg.mxu0
    %v590 = vmax.f32 %v491, 0.0
    %v591 = vmax.f32 %v493, 0.0
    %v592 = vmax.f32 %v574, 0.0
    %v593 = vmax.f32 %v576, 0.0
    %v594 = vmax.f32 %v497, 0.0
    %v595 = vmax.f32 %v499, 0.0
    %v596 = vmax.f32 %v580, 0.0
    %v597 = vmax.f32 %v582, 0.0
    %v598 = vmax.f32 %v503, 0.0
    %v599 = vmax.f32 %v505, 0.0
    %v600 = vmax.f32 %v586, 0.0
    %v601 = vmax.f32 %v588, 0.0
    %vm614 = vcmask 1045504
    %v615 = vrot.slane %v177, 2
    %v616 = vrot.slane %v183, 2
    %v617 = vsel %vm614, %v615, %v616
    %v618 = vrot.slane %v179, 2
    %v619 = vrot.slane %v185, 2
    %v620 = vsel %vm614, %v618, %v619
    %v621 = vrot.slane %v272, 2
    %v622 = vrot.slane %v278, 2
    %v623 = vsel %vm614, %v621, %v622
    %v624 = vrot.slane %v274, 2
    %v625 = vrot.slane %v280, 2
    %v626 = vsel %vm614, %v624, %v625
    %v627 = vrot.slane %v189, 2
    %v628 = vsel %vm614, %v616, %v627
    %v629 = vrot.slane %v191, 2
    %v630 = vsel %vm614, %v619, %v629
    %v631 = vrot.slane %v284, 2
    %v632 = vsel %vm614, %v622, %v631
    %v633 = vrot.slane %v286, 2
    %v634 = vsel %vm614, %v625, %v633
    %v647 = vadd.f32 %v590, %v617
    %v648 = vadd.f32 %v591, %v620
    %v649 = vadd.f32 %v592, %v623
    %v650 = vadd.f32 %v593, %v626
    %v651 = vadd.f32 %v594, %v628
    %v652 = vadd.f32 %v595, %v630
    %v653 = vadd.f32 %v596, %v632
    %v654 = vadd.f32 %v597, %v634
    %v655 = vadd.f32 %v598, %v627
    %v656 = vadd.f32 %v599, %v629
    %v657 = vadd.f32 %v600, %v631
    %v658 = vadd.f32 %v601, %v633
    %v659 = vmax.f32 %v647, 0.0
    %v660 = vmax.f32 %v648, 0.0
    %v661 = vmax.f32 %v649, 0.0
    %v662 = vmax.f32 %v650, 0.0
    %v663 = vmax.f32 %v651, 0.0
    %v664 = vmax.f32 %v652, 0.0
    %v665 = vmax.f32 %v653, 0.0
    %v666 = vmax.f32 %v654, 0.0
    %v667 = vmax.f32 %v655, 0.0
    %v668 = vmax.f32 %v656, 0.0
    %v669 = vmax.f32 %v657, 0.0
    %v670 = vmax.f32 %v658, 0.0
    %v671 = vld [vmem:[#allocation5 + $0x36] sm:$0xff]
    %v672 = vld [vmem:[#allocation5 + $0x3e] sm:$0xff]
    %v673 = vld [vmem:[#allocation5 + $0x46] sm:$0x3]
    %v674 = vld [vmem:[#allocation5 + $0x48] sm:$0xff]
    %v675 = vld [vmem:[#allocation5 + $0x50] sm:$0x1]
    %685 = vrot.lane.b32.xlu0 %v659, 16
    %v686 = vpop.permute.xlu0 %685
    %687 = vrot.lane.b32.xlu0 %v660, 16
    %v688 = vpop.permute.xlu0 %687
    %689 = vrot.lane.b32.xlu0 %v661, 16
    %v690 = vpop.permute.xlu0 %689
    %691 = vrot.lane.b32.xlu0 %v663, 16
    %v692 = vpop.permute.xlu0 %691
    %693 = vrot.lane.b32.xlu0 %v664, 16
    %v694 = vpop.permute.xlu0 %693
    %695 = vrot.lane.b32.xlu0 %v665, 16
    %v696 = vpop.permute.xlu0 %695
    %697 = vrot.lane.b32.xlu0 %v667, 16
    %v698 = vpop.permute.xlu0 %697
    %699 = vrot.lane.b32.xlu0 %v668, 16
    %v700 = vpop.permute.xlu0 %699
    %701 = vrot.lane.b32.xlu0 %v669, 16
    %v702 = vpop.permute.xlu0 %701
    %vm703 = vcmask 130048
    %v704 = vsel %vm703, %v686, %v688
    %v705 = vsel %vm703, %v688, %v690
    %v706 = vsel %vm703, %v692, %v694
    %v707 = vsel %vm703, %v694, %v696
    %v708 = vsel %vm703, %v698, %v700
    %v709 = vsel %vm703, %v700, %v702
    %v722 = vsel %vm703, 0.0, %v686
    %v723 = vsel %vm703, 0.0, %v692
    %v724 = vsel %vm703, 0.0, %v698
    %v728 = vrot.slane %v659, 6
    %v729 = vrot.slane %v660, 6
    %v730 = vrot.slane %v661, 6
    %v731 = vrot.slane %v662, 6
    %v732 = vrot.slane %v663, 6
    %v733 = vsel %vm360, %v728, %v732
    %v734 = vrot.slane %v664, 6
    %v735 = vsel %vm360, %v729, %v734
    %v736 = vrot.slane %v665, 6
    %v737 = vsel %vm360, %v730, %v736
    %v738 = vrot.slane %v666, 6
    %v739 = vsel %vm360, %v731, %v738
    %v740 = vrot.slane %v667, 6
    %v741 = vsel %vm360, %v732, %v740
    %v742 = vrot.slane %v668, 6
    %v743 = vsel %vm360, %v734, %v742
    %v744 = vrot.slane %v669, 6
    %v745 = vsel %vm360, %v736, %v744
    %v746 = vrot.slane %v670, 6
    %v747 = vsel %vm360, %v738, %v746
    %v760 = vsel %vm360, %v724, %v728
    %v761 = vsel %vm360, %v708, %v729
    %v762 = vsel %vm360, %v709, %v730
    %v763 = vsel %vm360, %v702, %v731
    %v764 = vsel %vm73, %v741, 1.0
    %v765 = vsel %vm73, %v743, 1.0
    %v766 = vsel %vm73, %v745, 1.0
    %v767 = vsel %vm73, %v747, 1.0
    %v769 = vsel %vm401, %v671, 0
    %v772 = vsel %vm401, %v672, 0
    %v775 = vsel %vm401, %v673, 0
    %v778 = vsel %vm411, %v764, 0
    %v781 = vsel %vm411, %v765, 0
    %v784 = vsel %vm411, %v766, 0
    %v787 = vsel %vm411, %v767, 0
    %789 = vmatprep.subr.mxu0 %v704
    %790 = vmatpush1.msra.mxu0 %v722
    %791 = vmatprep.subr.mxu0 %v706
    %792 = vmatpush1.msra.mxu0 %v723
    %793 = vmatprep.subr.mxu0 %v761
    %794 = vmatpush1.msra.mxu0 %v760
    %795 = vmatprep.subr.mxu0 %v735
    %796 = vmatpush1.msra.mxu0 %v733
    %797 = vmatprep.subr.mxu0 %v781
    %798 = vmatpush1.msra.mxu0 %v778
    %799 = vmatprep.subr.mxu0 0.0
    %800 = vmatpush1.msra.mxu0 0.0
    %801 = vmatprep.subr.mxu0 0.0
    %802 = vmatpush1.msra.mxu0 0.0
    %803 = vmatprep.subr.mxu0 0.0
    %804 = vmatpush1.msra.mxu0 0.0
    %805 = vmatprep.subr.mxu0 0.0
    %806 = vmatpush1.msra.mxu0 0.0
    %807 = vmatprep.subr.mxu0 0.0
    %808 = vmatpush1.msra.mxu0 0.0
    %809 = vmatprep.subr.mxu0 0.0
    %810 = vmatpush1.msra.mxu0 0.0
    %811 = vmatprep.subr.mxu0 0.0
    %812 = vmatpush1.msra.mxu0 0.0
    %813 = vmatprep.subr.mxu0 0.0
    %814 = vmatpush1.msra.mxu0 0.0
    %815 = vmatprep.subr.mxu0 0.0
    %816 = vmatpush1.msra.mxu0 0.0
    %817 = vmatprep.subr.mxu0 0.0
    %818 = vmatpush1.msra.mxu0 0.0
    %819 = vmatprep.subr.mxu0 0.0
    %820 = vmatpush1.msra.mxu0 0.0
    %821 = vmatprep.subr.mxu0 0.0
    %822 = vmatpush1.msra.mxu0 0.0
    %823 = vmatprep.subr.mxu0 0.0
    %824 = vmatpush1.msra.mxu0 0.0
    %825 = vmatprep.subr.mxu0 0.0
    %826 = vmatpush1.msra.mxu0 0.0
    %827 = vmatprep.subr.mxu0 0.0
    %828 = vmatpush1.msra.mxu0 0.0
    %829 = vmatprep.subr.mxu0 0.0
    %830 = vmatpush1.msra.mxu0 0.0
    %831 = vmatprep.subr.mxu0 0.0
    %832 = vmatpush1.msra.mxu0 0.0
    %833 = vmatprep.subr.mxu0 0.0
    %834 = vmatpush1.msra.mxu0 0.0
    %835 = vmatprep.subr.mxu0 0.0
    %836 = vmatpush1.msra.mxu0 0.0
    %837 = vmatprep.subr.mxu0 0.0
    %838 = vmatpush1.msra.mxu0 0.0
    %839 = vmatprep.subr.mxu0 0.0
    %840 = vmatpush1.msra.mxu0 0.0
    %841 = vmatprep.subr.mxu0 0.0
    %842 = vmatpush1.msra.mxu0 0.0
    %843 = vmatprep.subr.mxu0 0.0
    %844 = vmatpush1.msra.mxu0 0.0
    %845 = vmatprep.subr.mxu0 0.0
    %846 = vmatpush1.msra.mxu0 0.0
    %847 = vmatprep.subr.mxu0 0.0
    %848 = vmatpush1.msra.mxu0 0.0
    %849 = vmatprep.subr.mxu0 0.0
    %850 = vmatpush1.msra.mxu0 0.0
    %851 = vmatprep.subr.mxu0 0.0
    %852 = vmatpush1.msra.mxu0 0.0
    %853 = vmatprep.mubr.f32.mxu0 0.0
    %854 = vmatmul.mubr.f32.gmra.mrb[0].mxu0 %v769
    %v855 = vpop.f32.mrb[0].mxu0
    %v856 = vadd.f32 0.0, %v855
    %v857 = vpop.f32.mrb[0].mxu0
    %v858 = vadd.f32 0.0, %v857
    %859 = vmatprep.mubr.f32.mxu0 0.0
    %860 = vmatmul.mubr.f32.gmra.mrb[0].mxu0 %v772
    %v861 = vpop.f32.mrb[0].mxu0
    %v862 = vadd.f32 0.0, %v861
    %v863 = vpop.f32.mrb[0].mxu0
    %v864 = vadd.f32 0.0, %v863
    %865 = vmatprep.mubr.f32.mxu0 0.0
    %866 = vmatmul.mubr.f32.gmra.mrb[0].mxu0 %v775
    %v867 = vpop.f32.mrb[0].mxu0
    %v868 = vadd.f32 0.0, %v867
    %v869 = vpop.f32.mrb[0].mxu0
    %v870 = vadd.f32 0.0, %v869
    %871 = vdwg.mxu0
    %872 = vmatprep.subr.mxu0 %v690
    %873 = vmatpush1.msra.mxu0 %v705
    %874 = vmatprep.subr.mxu0 %v696
    %875 = vmatpush1.msra.mxu0 %v707
    %876 = vmatprep.subr.mxu0 %v763
    %877 = vmatpush1.msra.mxu0 %v762
    %878 = vmatprep.subr.mxu0 %v739
    %879 = vmatpush1.msra.mxu0 %v737
    %880 = vmatprep.subr.mxu0 %v787
    %881 = vmatpush1.msra.mxu0 %v784
    %882 = vmatprep.subr.mxu0 0.0
    %883 = vmatpush1.msra.mxu0 0.0
    %884 = vmatprep.subr.mxu0 0.0
    %885 = vmatpush1.msra.mxu0 0.0
    %886 = vmatprep.subr.mxu0 0.0
    %887 = vmatpush1.msra.mxu0 0.0
    %888 = vmatprep.subr.mxu0 0.0
    %889 = vmatpush1.msra.mxu0 0.0
    %890 = vmatprep.subr.mxu0 0.0
    %891 = vmatpush1.msra.mxu0 0.0
    %892 = vmatprep.subr.mxu0 0.0
    %893 = vmatpush1.msra.mxu0 0.0
    %894 = vmatprep.subr.mxu0 0.0
    %895 = vmatpush1.msra.mxu0 0.0
    %896 = vmatprep.subr.mxu0 0.0
    %897 = vmatpush1.msra.mxu0 0.0
    %898 = vmatprep.subr.mxu0 0.0
    %899 = vmatpush1.msra.mxu0 0.0
    %900 = vmatprep.subr.mxu0 0.0
    %901 = vmatpush1.msra.mxu0 0.0
    %902 = vmatprep.subr.mxu0 0.0
    %903 = vmatpush1.msra.mxu0 0.0
    %904 = vmatprep.subr.mxu0 0.0
    %905 = vmatpush1.msra.mxu0 0.0
    %906 = vmatprep.subr.mxu0 0.0
    %907 = vmatpush1.msra.mxu0 0.0
    %908 = vmatprep.subr.mxu0 0.0
    %909 = vmatpush1.msra.mxu0 0.0
    %910 = vmatprep.subr.mxu0 0.0
    %911 = vmatpush1.msra.mxu0 0.0
    %912 = vmatprep.subr.mxu0 0.0
    %913 = vmatpush1.msra.mxu0 0.0
    %914 = vmatprep.subr.mxu0 0.0
    %915 = vmatpush1.msra.mxu0 0.0
    %916 = vmatprep.subr.mxu0 0.0
    %917 = vmatpush1.msra.mxu0 0.0
    %918 = vmatprep.subr.mxu0 0.0
    %919 = vmatpush1.msra.mxu0 0.0
    %920 = vmatprep.subr.mxu0 0.0
    %921 = vmatpush1.msra.mxu0 0.0
    %922 = vmatprep.subr.mxu0 0.0
    %923 = vmatpush1.msra.mxu0 0.0
    %924 = vmatprep.subr.mxu0 0.0
    %925 = vmatpush1.msra.mxu0 0.0
    %926 = vmatprep.subr.mxu0 0.0
    %927 = vmatpush1.msra.mxu0 0.0
    %928 = vmatprep.subr.mxu0 0.0
    %929 = vmatpush1.msra.mxu0 0.0
    %930 = vmatprep.subr.mxu0 0.0
    %931 = vmatpush1.msra.mxu0 0.0
    %932 = vmatprep.subr.mxu0 0.0
    %933 = vmatpush1.msra.mxu0 0.0
    %934 = vmatprep.subr.mxu0 0.0
    %935 = vmatpush1.msra.mxu0 0.0
    %936 = vmatprep.mubr.f32.mxu0 0.0
    %937 = vmatmul.mubr.f32.gmra.mrb[0].mxu0 %v769
    %v938 = vpop.f32.mrb[0].mxu0
    %v939 = vadd.f32 0.0, %v938
    %v940 = vpop.f32.mrb[0].mxu0
    %v941 = vadd.f32 0.0, %v940
    %942 = vmatprep.mubr.f32.mxu0 0.0
    %943 = vmatmul.mubr.f32.gmra.mrb[0].mxu0 %v772
    %v944 = vpop.f32.mrb[0].mxu0
    %v945 = vadd.f32 0.0, %v944
    %v946 = vpop.f32.mrb[0].mxu0
    %v947 = vadd.f32 0.0, %v946
    %948 = vmatprep.mubr.f32.mxu0 0.0
    %949 = vmatmul.mubr.f32.gmra.mrb[0].mxu0 %v775
    %v950 = vpop.f32.mrb[0].mxu0
    %v951 = vadd.f32 0.0, %v950
    %v952 = vpop.f32.mrb[0].mxu0
    %v953 = vadd.f32 0.0, %v952
    %954 = vdwg.mxu0
    %v955 = vmax.f32 %v856, 0.0
    %v956 = vmax.f32 %v858, 0.0
    %v957 = vmax.f32 %v939, 0.0
    %v958 = vmax.f32 %v941, 0.0
    %v959 = vmax.f32 %v862, 0.0
    %v960 = vmax.f32 %v864, 0.0
    %v961 = vmax.f32 %v945, 0.0
    %v962 = vmax.f32 %v947, 0.0
    %969 = vrot.lane.b32.xlu0 %v955, 16
    %v970 = vpop.permute.xlu0 %969
    %971 = vrot.lane.b32.xlu0 %v956, 16
    %v972 = vpop.permute.xlu0 %971
    %973 = vrot.lane.b32.xlu0 %v957, 16
    %v974 = vpop.permute.xlu0 %973
    %975 = vrot.lane.b32.xlu0 %v959, 16
    %v976 = vpop.permute.xlu0 %975
    %977 = vrot.lane.b32.xlu0 %v960, 16
    %v978 = vpop.permute.xlu0 %977
    %979 = vrot.lane.b32.xlu0 %v961, 16
    %v980 = vpop.permute.xlu0 %979
    %v981 = vsel %vm703, %v970, %v972
    %v982 = vsel %vm703, %v972, %v974
    %v983 = vsel %vm703, %v976, %v978
    %v984 = vsel %vm703, %v978, %v980
    %v993 = vsel %vm703, 0.0, %v970
    %v994 = vsel %vm703, 0.0, %v976
    %v997 = vrot.slane %v955, 7
    %v998 = vrot.slane %v956, 7
    %v999 = vrot.slane %v957, 7
    %v1000 = vrot.slane %v958, 7
    %v1001 = vrot.slane %v959, 7
    %v1002 = vsel %vm94, %v997, %v1001
    %v1003 = vrot.slane %v960, 7
    %v1004 = vsel %vm94, %v998, %v1003
    %v1005 = vrot.slane %v961, 7
    %v1006 = vsel %vm94, %v999, %v1005
    %v1007 = vrot.slane %v962, 7
    %v1008 = vsel %vm94, %v1000, %v1007
    %v1017 = vsel %vm94, %v994, %v997
    %v1018 = vsel %vm94, %v983, %v998
    %v1019 = vsel %vm94, %v984, %v999
    %v1020 = vsel %vm94, %v980, %v1000
    %v1021 = vsel %vm360, %v1002, 1.0
    %v1022 = vsel %vm360, %v1004, 1.0
    %v1023 = vsel %vm360, %v1006, 1.0
    %v1024 = vsel %vm360, %v1008, 1.0
    %vm1025 = vcmask 154624
    %v1027 = vsel %vm1025, %v674, 0
    %v1030 = vsel %vm1025, %v675, 0
    %vm1032 = vcmask 1042432
    %v1034 = vsel %vm1032, %v1021, 0
    %v1037 = vsel %vm1032, %v1022, 0
    %v1040 = vsel %vm1032, %v1023, 0
    %v1043 = vsel %vm1032, %v1024, 0
    %1045 = vmatprep.subr.mxu0 %v981
    %1046 = vmatpush1.msra.mxu0 %v993
    %1047 = vmatprep.subr.mxu0 %v1018
    %1048 = vmatpush1.msra.mxu0 %v1017
    %1049 = vmatprep.subr.mxu0 %v1037
    %1050 = vmatpush1.msra.mxu0 %v1034
    %1051 = vmatprep.subr.mxu0 0.0
    %1052 = vmatpush1.msra.mxu0 0.0
    %1053 = vmatprep.subr.mxu0 0.0
    %1054 = vmatpush1.msra.mxu0 0.0
    %1055 = vmatprep.subr.mxu0 0.0
    %1056 = vmatpush1.msra.mxu0 0.0
    %1057 = vmatprep.subr.mxu0 0.0
    %1058 = vmatpush1.msra.mxu0 0.0
    %1059 = vmatprep.subr.mxu0 0.0
    %1060 = vmatpush1.msra.mxu0 0.0
    %1061 = vmatprep.subr.mxu0 0.0
    %1062 = vmatpush1.msra.mxu0 0.0
    %1063 = vmatprep.subr.mxu0 0.0
    %1064 = vmatpush1.msra.mxu0 0.0
    %1065 = vmatprep.subr.mxu0 0.0
    %1066 = vmatpush1.msra.mxu0 0.0
    %1067 = vmatprep.subr.mxu0 0.0
    %1068 = vmatpush1.msra.mxu0 0.0
    %1069 = vmatprep.subr.mxu0 0.0
    %1070 = vmatpush1.msra.mxu0 0.0
    %1071 = vmatprep.subr.mxu0 0.0
    %1072 = vmatpush1.msra.mxu0 0.0
    %1073 = vmatprep.subr.mxu0 0.0
    %1074 = vmatpush1.msra.mxu0 0.0
    %1075 = vmatprep.subr.mxu0 0.0
    %1076 = vmatpush1.msra.mxu0 0.0
    %1077 = vmatprep.subr.mxu0 0.0
    %1078 = vmatpush1.msra.mxu0 0.0
    %1079 = vmatprep.subr.mxu0 0.0
    %1080 = vmatpush1.msra.mxu0 0.0
    %1081 = vmatprep.subr.mxu0 0.0
    %1082 = vmatpush1.msra.mxu0 0.0
    %1083 = vmatprep.subr.mxu0 0.0
    %1084 = vmatpush1.msra.mxu0 0.0
    %1085 = vmatprep.subr.mxu0 0.0
    %1086 = vmatpush1.msra.mxu0 0.0
    %1087 = vmatprep.subr.mxu0 0.0
    %1088 = vmatpush1.msra.mxu0 0.0
    %1089 = vmatprep.subr.mxu0 0.0
    %1090 = vmatpush1.msra.mxu0 0.0
    %1091 = vmatprep.subr.mxu0 0.0
    %1092 = vmatpush1.msra.mxu0 0.0
    %1093 = vmatprep.subr.mxu0 0.0
    %1094 = vmatpush1.msra.mxu0 0.0
    %1095 = vmatprep.subr.mxu0 0.0
    %1096 = vmatpush1.msra.mxu0 0.0
    %1097 = vmatprep.subr.mxu0 0.0
    %1098 = vmatpush1.msra.mxu0 0.0
    %1099 = vmatprep.subr.mxu0 0.0
    %1100 = vmatpush1.msra.mxu0 0.0
    %1101 = vmatprep.subr.mxu0 0.0
    %1102 = vmatpush1.msra.mxu0 0.0
    %1103 = vmatprep.subr.mxu0 0.0
    %1104 = vmatpush1.msra.mxu0 0.0
    %1105 = vmatprep.subr.mxu0 0.0
    %1106 = vmatpush1.msra.mxu0 0.0
    %1107 = vmatprep.subr.mxu0 0.0
    %1108 = vmatpush1.msra.mxu0 0.0
    %1109 = vmatprep.mubr.f32.mxu0 0.0
    %1110 = vmatmul.mubr.f32.gmra.mrb[0].mxu0 %v1027
    %v1111 = vpop.f32.mrb[0].mxu0
    %v1112 = vadd.f32 0.0, %v1111
    %v1113 = vpop.f32.mrb[0].mxu0
    %v1114 = vadd.f32 0.0, %v1113
    %1115 = vmatprep.mubr.f32.mxu0 0.0
    %1116 = vmatmul.mubr.f32.gmra.mrb[0].mxu0 %v1030
    %v1117 = vpop.f32.mrb[0].mxu0
    %v1118 = vadd.f32 0.0, %v1117
    %v1119 = vpop.f32.mrb[0].mxu0
    %v1120 = vadd.f32 0.0, %v1119
    %1121 = vdwg.mxu0
    %1122 = vmatprep.subr.mxu0 %v974
    %1123 = vmatpush1.msra.mxu0 %v982
    %1124 = vmatprep.subr.mxu0 %v1020
    %1125 = vmatpush1.msra.mxu0 %v1019
    %1126 = vmatprep.subr.mxu0 %v1043
    %1127 = vmatpush1.msra.mxu0 %v1040
    %1128 = vmatprep.subr.mxu0 0.0
    %1129 = vmatpush1.msra.mxu0 0.0
    %1130 = vmatprep.subr.mxu0 0.0
    %1131 = vmatpush1.msra.mxu0 0.0
    %1132 = vmatprep.subr.mxu0 0.0
    %1133 = vmatpush1.msra.mxu0 0.0
    %1134 = vmatprep.subr.mxu0 0.0
    %1135 = vmatpush1.msra.mxu0 0.0
    %1136 = vmatprep.subr.mxu0 0.0
    %1137 = vmatpush1.msra.mxu0 0.0
    %1138 = vmatprep.subr.mxu0 0.0
    %1139 = vmatpush1.msra.mxu0 0.0
    %1140 = vmatprep.subr.mxu0 0.0
    %1141 = vmatpush1.msra.mxu0 0.0
    %1142 = vmatprep.subr.mxu0 0.0
    %1143 = vmatpush1.msra.mxu0 0.0
    %1144 = vmatprep.subr.mxu0 0.0
    %1145 = vmatpush1.msra.mxu0 0.0
    %1146 = vmatprep.subr.mxu0 0.0
    %1147 = vmatpush1.msra.mxu0 0.0
    %1148 = vmatprep.subr.mxu0 0.0
    %1149 = vmatpush1.msra.mxu0 0.0
    %1150 = vmatprep.subr.mxu0 0.0
    %1151 = vmatpush1.msra.mxu0 0.0
    %1152 = vmatprep.subr.mxu0 0.0
    %1153 = vmatpush1.msra.mxu0 0.0
    %1154 = vmatprep.subr.mxu0 0.0
    %1155 = vmatpush1.msra.mxu0 0.0
    %1156 = vmatprep.subr.mxu0 0.0
    %1157 = vmatpush1.msra.mxu0 0.0
    %1158 = vmatprep.subr.mxu0 0.0
    %1159 = vmatpush1.msra.mxu0 0.0
    %1160 = vmatprep.subr.mxu0 0.0
    %1161 = vmatpush1.msra.mxu0 0.0
    %1162 = vmatprep.subr.mxu0 0.0
    %1163 = vmatpush1.msra.mxu0 0.0
    %1164 = vmatprep.subr.mxu0 0.0
    %1165 = vmatpush1.msra.mxu0 0.0
    %1166 = vmatprep.subr.mxu0 0.0
    %1167 = vmatpush1.msra.mxu0 0.0
    %1168 = vmatprep.subr.mxu0 0.0
    %1169 = vmatpush1.msra.mxu0 0.0
    %1170 = vmatprep.subr.mxu0 0.0
    %1171 = vmatpush1.msra.mxu0 0.0
    %1172 = vmatprep.subr.mxu0 0.0
    %1173 = vmatpush1.msra.mxu0 0.0
    %1174 = vmatprep.subr.mxu0 0.0
    %1175 = vmatpush1.msra.mxu0 0.0
    %1176 = vmatprep.subr.mxu0 0.0
    %1177 = vmatpush1.msra.mxu0 0.0
    %1178 = vmatprep.subr.mxu0 0.0
    %1179 = vmatpush1.msra.mxu0 0.0
    %1180 = vmatprep.subr.mxu0 0.0
    %1181 = vmatpush1.msra.mxu0 0.0
    %1182 = vmatprep.subr.mxu0 0.0
    %1183 = vmatpush1.msra.mxu0 0.0
    %1184 = vmatprep.subr.mxu0 0.0
    %1185 = vmatpush1.msra.mxu0 0.0
    %1186 = vmatprep.mubr.f32.mxu0 0.0
    %1187 = vmatmul.mubr.f32.gmra.mrb[0].mxu0 %v1027
    %v1188 = vpop.f32.mrb[0].mxu0
    %v1189 = vadd.f32 0.0, %v1188
    %v1190 = vpop.f32.mrb[0].mxu0
    %v1191 = vadd.f32 0.0, %v1190
    %1192 = vmatprep.mubr.f32.mxu0 0.0
    %1193 = vmatmul.mubr.f32.gmra.mrb[0].mxu0 %v1030
    %v1194 = vpop.f32.mrb[0].mxu0
    %v1195 = vadd.f32 0.0, %v1194
    %v1196 = vpop.f32.mrb[0].mxu0
    %v1197 = vadd.f32 0.0, %v1196
    %1198 = vdwg.mxu0
    %v1199 = vmax.f32 %v1112, 0.0
    %v1200 = vmax.f32 %v1114, 0.0
    %v1201 = vmax.f32 %v1189, 0.0
    %v1202 = vmax.f32 %v1191, 0.0
    %v1203 = vmax.f32 %v1118, 0.0
    %v1204 = vmax.f32 %v1120, 0.0
    %v1205 = vmax.f32 %v1195, 0.0
    %v1206 = vmax.f32 %v1197, 0.0
    %vm1215 = vcmask 1046528
    %v1216 = vrot.slane %v862, 1
    %v1217 = vrot.slane %v868, 1
    %v1218 = vsel %vm1215, %v1216, %v1217
    %v1219 = vrot.slane %v864, 1
    %v1220 = vrot.slane %v870, 1
    %v1221 = vsel %vm1215, %v1219, %v1220
    %v1222 = vrot.slane %v945, 1
    %v1223 = vrot.slane %v951, 1
    %v1224 = vsel %vm1215, %v1222, %v1223
    %v1225 = vrot.slane %v947, 1
    %v1226 = vrot.slane %v953, 1
    %v1227 = vsel %vm1215, %v1225, %v1226
    %v1236 = vadd.f32 %v1199, %v1218
    %v1237 = vadd.f32 %v1200, %v1221
    %v1238 = vadd.f32 %v1201, %v1224
    %v1239 = vadd.f32 %v1202, %v1227
    %v1240 = vadd.f32 %v1203, %v1217
    %v1241 = vadd.f32 %v1204, %v1220
    %v1242 = vadd.f32 %v1205, %v1223
    %v1243 = vadd.f32 %v1206, %v1226
    %v1244 = vmax.f32 %v1236, 0.0
    %v1245 = vmax.f32 %v1237, 0.0
    %v1246 = vmax.f32 %v1238, 0.0
    %v1247 = vmax.f32 %v1239, 0.0
    %v1248 = vmax.f32 %v1240, 0.0
    %v1249 = vmax.f32 %v1241, 0.0
    %v1250 = vmax.f32 %v1242, 0.0
    %v1251 = vmax.f32 %v1243, 0.0
    %v1252 = vld [vmem:[#allocation5 + $0x51] sm:$0xff]
    %v1253 = vld [vmem:[#allocation5 + $0x59] sm:$0x3]
    %v1254 = vld [vmem:[#allocation5 + $0x5b] sm:$0x1f]
    %1261 = vrot.lane.b32.xlu0 %v1244, 32
    %v1262 = vpop.permute.xlu0 %1261
    %1263 = vrot.lane.b32.xlu0 %v1245, 32
    %v1264 = vpop.permute.xlu0 %1263
    %1265 = vrot.lane.b32.xlu0 %v1246, 32
    %v1266 = vpop.permute.xlu0 %1265
    %1267 = vrot.lane.b32.xlu0 %v1248, 32
    %v1268 = vpop.permute.xlu0 %1267
    %1269 = vrot.lane.b32.xlu0 %v1249, 32
    %v1270 = vpop.permute.xlu0 %1269
    %1271 = vrot.lane.b32.xlu0 %v1250, 32
    %v1272 = vpop.permute.xlu0 %1271
    %vm1273 = vcmask 261120
    %v1274 = vsel %vm1273, %v1262, %v1264
    %v1275 = vsel %vm1273, %v1264, %v1266
    %v1276 = vsel %vm1273, %v1268, %v1270
    %v1277 = vsel %vm1273, %v1270, %v1272
    %v1286 = vsel %vm1273, 0.0, %v1262
    %v1287 = vsel %vm1273, 0.0, %v1268
    %v1290 = vrot.slane %v1244, 7
    %v1291 = vrot.slane %v1245, 7
    %v1292 = vrot.slane %v1246, 7
    %v1293 = vrot.slane %v1247, 7
    %v1294 = vrot.slane %v1248, 7
    %v1295 = vsel %vm94, %v1290, %v1294
    %v1296 = vrot.slane %v1249, 7
    %v1297 = vsel %vm94, %v1291, %v1296
    %v1298 = vrot.slane %v1250, 7
    %v1299 = vsel %vm94, %v1292, %v1298
    %v1300 = vrot.slane %v1251, 7
    %v1301 = vsel %vm94, %v1293, %v1300
    %v1310 = vsel %vm94, %v1287, %v1290
    %v1311 = vsel %vm94, %v1276, %v1291
    %v1312 = vsel %vm94, %v1277, %v1292
    %v1313 = vsel %vm94, %v1272, %v1293
    %v1314 = vsel %vm360, %v1295, 1.0
    %v1315 = vsel %vm360, %v1297, 1.0
    %v1316 = vsel %vm360, %v1299, 1.0
    %v1317 = vsel %vm360, %v1301, 1.0
    %v1319 = vsel %vm1025, %v1252, 0
    %v1322 = vsel %vm1025, %v1253, 0
    %v1325 = vsel %vm1032, %v1314, 0
    %v1328 = vsel %vm1032, %v1315, 0
    %v1331 = vsel %vm1032, %v1316, 0
    %v1334 = vsel %vm1032, %v1317, 0
    %1336 = vmatprep.subr.mxu0 %v1274
    %1337 = vmatpush1.msra.mxu0 %v1286
    %1338 = vmatprep.subr.mxu0 %v1311
    %1339 = vmatpush1.msra.mxu0 %v1310
    %1340 = vmatprep.subr.mxu0 %v1328
    %1341 = vmatpush1.msra.mxu0 %v1325
    %1342 = vmatprep.subr.mxu0 0.0
    %1343 = vmatpush1.msra.mxu0 0.0
    %1344 = vmatprep.subr.mxu0 0.0
    %1345 = vmatpush1.msra.mxu0 0.0
    %1346 = vmatprep.subr.mxu0 0.0
    %1347 = vmatpush1.msra.mxu0 0.0
    %1348 = vmatprep.subr.mxu0 0.0
    %1349 = vmatpush1.msra.mxu0 0.0
    %1350 = vmatprep.subr.mxu0 0.0
    %1351 = vmatpush1.msra.mxu0 0.0
    %1352 = vmatprep.subr.mxu0 0.0
    %1353 = vmatpush1.msra.mxu0 0.0
    %1354 = vmatprep.subr.mxu0 0.0
    %1355 = vmatpush1.msra.mxu0 0.0
    %1356 = vmatprep.subr.mxu0 0.0
    %1357 = vmatpush1.msra.mxu0 0.0
    %1358 = vmatprep.subr.mxu0 0.0
    %1359 = vmatpush1.msra.mxu0 0.0
    %1360 = vmatprep.subr.mxu0 0.0
    %1361 = vmatpush1.msra.mxu0 0.0
    %1362 = vmatprep.subr.mxu0 0.0
    %1363 = vmatpush1.msra.mxu0 0.0
    %1364 = vmatprep.subr.mxu0 0.0
    %1365 = vmatpush1.msra.mxu0 0.0
    %1366 = vmatprep.subr.mxu0 0.0
    %1367 = vmatpush1.msra.mxu0 0.0
    %1368 = vmatprep.subr.mxu0 0.0
    %1369 = vmatpush1.msra.mxu0 0.0
    %1370 = vmatprep.subr.mxu0 0.0
    %1371 = vmatpush1.msra.mxu0 0.0
    %1372 = vmatprep.subr.mxu0 0.0
    %1373 = vmatpush1.msra.mxu0 0.0
    %1374 = vmatprep.subr.mxu0 0.0
    %1375 = vmatpush1.msra.mxu0 0.0
    %1376 = vmatprep.subr.mxu0 0.0
    %1377 = vmatpush1.msra.mxu0 0.0
    %1378 = vmatprep.subr.mxu0 0.0
    %1379 = vmatpush1.msra.mxu0 0.0
    %1380 = vmatprep.subr.mxu0 0.0
    %1381 = vmatpush1.msra.mxu0 0.0
    %1382 = vmatprep.subr.mxu0 0.0
    %1383 = vmatpush1.msra.mxu0 0.0
    %1384 = vmatprep.subr.mxu0 0.0
    %1385 = vmatpush1.msra.mxu0 0.0
    %1386 = vmatprep.subr.mxu0 0.0
    %1387 = vmatpush1.msra.mxu0 0.0
    %1388 = vmatprep.subr.mxu0 0.0
    %1389 = vmatpush1.msra.mxu0 0.0
    %1390 = vmatprep.subr.mxu0 0.0
    %1391 = vmatpush1.msra.mxu0 0.0
    %1392 = vmatprep.subr.mxu0 0.0
    %1393 = vmatpush1.msra.mxu0 0.0
    %1394 = vmatprep.subr.mxu0 0.0
    %1395 = vmatpush1.msra.mxu0 0.0
    %1396 = vmatprep.subr.mxu0 0.0
    %1397 = vmatpush1.msra.mxu0 0.0
    %1398 = vmatprep.subr.mxu0 0.0
    %1399 = vmatpush1.msra.mxu0 0.0
    %1400 = vmatprep.mubr.f32.mxu0 0.0
    %1401 = vmatmul.mubr.f32.gmra.mrb[0].mxu0 %v1319
    %v1402 = vpop.f32.mrb[0].mxu0
    %v1403 = vadd.f32 0.0, %v1402
    %v1404 = vpop.f32.mrb[0].mxu0
    %v1405 = vadd.f32 0.0, %v1404
    %1406 = vmatprep.mubr.f32.mxu0 0.0
    %1407 = vmatmul.mubr.f32.gmra.mrb[0].mxu0 %v1322
    %v1408 = vpop.f32.mrb[0].mxu0
    %v1409 = vadd.f32 0.0, %v1408
    %v1410 = vpop.f32.mrb[0].mxu0
    %v1411 = vadd.f32 0.0, %v1410
    %1412 = vdwg.mxu0
    %1413 = vmatprep.subr.mxu0 %v1266
    %1414 = vmatpush1.msra.mxu0 %v1275
    %1415 = vmatprep.subr.mxu0 %v1313
    %1416 = vmatpush1.msra.mxu0 %v1312
    %1417 = vmatprep.subr.mxu0 %v1334
    %1418 = vmatpush1.msra.mxu0 %v1331
    %1419 = vmatprep.subr.mxu0 0.0
    %1420 = vmatpush1.msra.mxu0 0.0
    %1421 = vmatprep.subr.mxu0 0.0
    %1422 = vmatpush1.msra.mxu0 0.0
    %1423 = vmatprep.subr.mxu0 0.0
    %1424 = vmatpush1.msra.mxu0 0.0
    %1425 = vmatprep.subr.mxu0 0.0
    %1426 = vmatpush1.msra.mxu0 0.0
    %1427 = vmatprep.subr.mxu0 0.0
    %1428 = vmatpush1.msra.mxu0 0.0
    %1429 = vmatprep.subr.mxu0 0.0
    %1430 = vmatpush1.msra.mxu0 0.0
    %1431 = vmatprep.subr.mxu0 0.0
    %1432 = vmatpush1.msra.mxu0 0.0
    %1433 = vmatprep.subr.mxu0 0.0
    %1434 = vmatpush1.msra.mxu0 0.0
    %1435 = vmatprep.subr.mxu0 0.0
    %1436 = vmatpush1.msra.mxu0 0.0
    %1437 = vmatprep.subr.mxu0 0.0
    %1438 = vmatpush1.msra.mxu0 0.0
    %1439 = vmatprep.subr.mxu0 0.0
    %1440 = vmatpush1.msra.mxu0 0.0
    %1441 = vmatprep.subr.mxu0 0.0
    %1442 = vmatpush1.msra.mxu0 0.0
    %1443 = vmatprep.subr.mxu0 0.0
    %1444 = vmatpush1.msra.mxu0 0.0
    %1445 = vmatprep.subr.mxu0 0.0
    %1446 = vmatpush1.msra.mxu0 0.0
    %1447 = vmatprep.subr.mxu0 0.0
    %1448 = vmatpush1.msra.mxu0 0.0
    %1449 = vmatprep.subr.mxu0 0.0
    %1450 = vmatpush1.msra.mxu0 0.0
    %1451 = vmatprep.subr.mxu0 0.0
    %1452 = vmatpush1.msra.mxu0 0.0
    %1453 = vmatprep.subr.mxu0 0.0
    %1454 = vmatpush1.msra.mxu0 0.0
    %1455 = vmatprep.subr.mxu0 0.0
    %1456 = vmatpush1.msra.mxu0 0.0
    %1457 = vmatprep.subr.mxu0 0.0
    %1458 = vmatpush1.msra.mxu0 0.0
    %1459 = vmatprep.subr.mxu0 0.0
    %1460 = vmatpush1.msra.mxu0 0.0
    %1461 = vmatprep.subr.mxu0 0.0
    %1462 = vmatpush1.msra.mxu0 0.0
    %1463 = vmatprep.subr.mxu0 0.0
    %1464 = vmatpush1.msra.mxu0 0.0
    %1465 = vmatprep.subr.mxu0 0.0
    %1466 = vmatpush1.msra.mxu0 0.0
    %1467 = vmatprep.subr.mxu0 0.0
    %1468 = vmatpush1.msra.mxu0 0.0
    %1469 = vmatprep.subr.mxu0 0.0
    %1470 = vmatpush1.msra.mxu0 0.0
    %1471 = vmatprep.subr.mxu0 0.0
    %1472 = vmatpush1.msra.mxu0 0.0
    %1473 = vmatprep.subr.mxu0 0.0
    %1474 = vmatpush1.msra.mxu0 0.0
    %1475 = vmatprep.subr.mxu0 0.0
    %1476 = vmatpush1.msra.mxu0 0.0
    %1477 = vmatprep.mubr.f32.mxu0 0.0
    %1478 = vmatmul.mubr.f32.gmra.mrb[0].mxu0 %v1319
    %v1479 = vpop.f32.mrb[0].mxu0
    %v1480 = vadd.f32 0.0, %v1479
    %v1481 = vpop.f32.mrb[0].mxu0
    %v1482 = vadd.f32 0.0, %v1481
    %1483 = vmatprep.mubr.f32.mxu0 0.0
    %1484 = vmatmul.mubr.f32.gmra.mrb[0].mxu0 %v1322
    %v1485 = vpop.f32.mrb[0].mxu0
    %v1486 = vadd.f32 0.0, %v1485
    %v1487 = vpop.f32.mrb[0].mxu0
    %v1488 = vadd.f32 0.0, %v1487
    %1489 = vdwg.mxu0
    %v1490 = vmax.f32 %v1403, 0.0
    %v1491 = vmax.f32 %v1405, 0.0
    %v1492 = vmax.f32 %v1480, 0.0
    %v1493 = vmax.f32 %v1482, 0.0
    %1497 = vrot.lane.b32.xlu0 %v1490, 32
    %v1498 = vpop.permute.xlu0 %1497
    %1499 = vrot.lane.b32.xlu0 %v1491, 32
    %v1500 = vpop.permute.xlu0 %1499
    %1501 = vrot.lane.b32.xlu0 %v1492, 32
    %v1502 = vpop.permute.xlu0 %1501
    %v1503 = vsel %vm1273, %v1498, %v1500
    %v1504 = vsel %vm1273, %v1500, %v1502
    %v1509 = vsel %vm1273, 0.0, %v1498
    %v1511 = vrot.slane %v1490, 3
    %v1512 = vrot.slane %v1491, 3
    %v1513 = vrot.slane %v1492, 3
    %v1514 = vrot.slane %v1493, 3
    %v1519 = vsel %vm411, %v1509, %v1511
    %v1520 = vsel %vm411, %v1503, %v1512
    %v1521 = vsel %vm411, %v1504, %v1513
    %v1522 = vsel %vm411, %v1502, %v1514
    %v1523 = vsel %vm360, %v1511, 1.0
    %v1524 = vsel %vm360, %v1512, 1.0
    %v1525 = vsel %vm360, %v1513, 1.0
    %v1526 = vsel %vm360, %v1514, 1.0
    %vm1527 = vcmask 89088
    %v1529 = vsel %vm1527, %v1254, 0
    %v1532 = vsel %vm1032, %v1523, 0
    %v1535 = vsel %vm1032, %v1524, 0
    %v1538 = vsel %vm1032, %v1525, 0
    %v1541 = vsel %vm1032, %v1526, 0
    %1543 = vmatprep.subr.mxu0 %v1520
    %1544 = vmatpush1.msra.mxu0 %v1519
    %1545 = vmatprep.subr.mxu0 %v1535
    %1546 = vmatpush1.msra.mxu0 %v1532
    %1547 = vmatprep.subr.mxu0 0.0
    %1548 = vmatpush1.msra.mxu0 0.0
    %1549 = vmatprep.subr.mxu0 0.0
    %1550 = vmatpush1.msra.mxu0 0.0
    %1551 = vmatprep.subr.mxu0 0.0
    %1552 = vmatpush1.msra.mxu0 0.0
    %1553 = vmatprep.subr.mxu0 0.0
    %1554 = vmatpush1.msra.mxu0 0.0
    %1555 = vmatprep.subr.mxu0 0.0
    %1556 = vmatpush1.msra.mxu0 0.0
    %1557 = vmatprep.subr.mxu0 0.0
    %1558 = vmatpush1.msra.mxu0 0.0
    %1559 = vmatprep.subr.mxu0 0.0
    %1560 = vmatpush1.msra.mxu0 0.0
    %1561 = vmatprep.subr.mxu0 0.0
    %1562 = vmatpush1.msra.mxu0 0.0
    %1563 = vmatprep.subr.mxu0 0.0
    %1564 = vmatpush1.msra.mxu0 0.0
    %1565 = vmatprep.subr.mxu0 0.0
    %1566 = vmatpush1.msra.mxu0 0.0
    %1567 = vmatprep.subr.mxu0 0.0
    %1568 = vmatpush1.msra.mxu0 0.0
    %1569 = vmatprep.subr.mxu0 0.0
    %1570 = vmatpush1.msra.mxu0 0.0
    %1571 = vmatprep.subr.mxu0 0.0
    %1572 = vmatpush1.msra.mxu0 0.0
    %1573 = vmatprep.subr.mxu0 0.0
    %1574 = vmatpush1.msra.mxu0 0.0
    %1575 = vmatprep.subr.mxu0 0.0
    %1576 = vmatpush1.msra.mxu0 0.0
    %1577 = vmatprep.subr.mxu0 0.0
    %1578 = vmatpush1.msra.mxu0 0.0
    %1579 = vmatprep.subr.mxu0 0.0
    %1580 = vmatpush1.msra.mxu0 0.0
    %1581 = vmatprep.subr.mxu0 0.0
    %1582 = vmatpush1.msra.mxu0 0.0
    %1583 = vmatprep.subr.mxu0 0.0
    %1584 = vmatpush1.msra.mxu0 0.0
    %1585 = vmatprep.subr.mxu0 0.0
    %1586 = vmatpush1.msra.mxu0 0.0
    %1587 = vmatprep.subr.mxu0 0.0
    %1588 = vmatpush1.msra.mxu0 0.0
    %1589 = vmatprep.subr.mxu0 0.0
    %1590 = vmatpush1.msra.mxu0 0.0
    %1591 = vmatprep.subr.mxu0 0.0
    %1592 = vmatpush1.msra.mxu0 0.0
    %1593 = vmatprep.subr.mxu0 0.0
    %1594 = vmatpush1.msra.mxu0 0.0
    %1595 = vmatprep.subr.mxu0 0.0
    %1596 = vmatpush1.msra.mxu0 0.0
    %1597 = vmatprep.subr.mxu0 0.0
    %1598 = vmatpush1.msra.mxu0 0.0
    %1599 = vmatprep.subr.mxu0 0.0
    %1600 = vmatpush1.msra.mxu0 0.0
    %1601 = vmatprep.subr.mxu0 0.0
    %1602 = vmatpush1.msra.mxu0 0.0
    %1603 = vmatprep.subr.mxu0 0.0
    %1604 = vmatpush1.msra.mxu0 0.0
    %1605 = vmatprep.subr.mxu0 0.0
    %1606 = vmatpush1.msra.mxu0 0.0
    %1607 = vmatprep.mubr.f32.mxu0 0.0
    %1608 = vmatmul.mubr.f32.gmra.mrb[0].mxu0 %v1529
    %v1609 = vpop.f32.mrb[0].mxu0
    %v1610 = vadd.f32 0.0, %v1609
    %v1611 = vpop.f32.mrb[0].mxu0
    %v1612 = vadd.f32 0.0, %v1611
    %1613 = vdwg.mxu0
    %1614 = vmatprep.subr.mxu0 %v1522
    %1615 = vmatpush1.msra.mxu0 %v1521
    %1616 = vmatprep.subr.mxu0 %v1541
    %1617 = vmatpush1.msra.mxu0 %v1538
    %1618 = vmatprep.subr.mxu0 0.0
    %1619 = vmatpush1.msra.mxu0 0.0
    %1620 = vmatprep.subr.mxu0 0.0
    %1621 = vmatpush1.msra.mxu0 0.0
    %1622 = vmatprep.subr.mxu0 0.0
    %1623 = vmatpush1.msra.mxu0 0.0
    %1624 = vmatprep.subr.mxu0 0.0
    %1625 = vmatpush1.msra.mxu0 0.0
    %1626 = vmatprep.subr.mxu0 0.0
    %1627 = vmatpush1.msra.mxu0 0.0
    %1628 = vmatprep.subr.mxu0 0.0
    %1629 = vmatpush1.msra.mxu0 0.0
    %1630 = vmatprep.subr.mxu0 0.0
    %1631 = vmatpush1.msra.mxu0 0.0
    %1632 = vmatprep.subr.mxu0 0.0
    %1633 = vmatpush1.msra.mxu0 0.0
    %1634 = vmatprep.subr.mxu0 0.0
    %1635 = vmatpush1.msra.mxu0 0.0
    %1636 = vmatprep.subr.mxu0 0.0
    %1637 = vmatpush1.msra.mxu0 0.0
    %1638 = vmatprep.subr.mxu0 0.0
    %1639 = vmatpush1.msra.mxu0 0.0
    %1640 = vmatprep.subr.mxu0 0.0
    %1641 = vmatpush1.msra.mxu0 0.0
    %1642 = vmatprep.subr.mxu0 0.0
    %1643 = vmatpush1.msra.mxu0 0.0
    %1644 = vmatprep.subr.mxu0 0.0
    %1645 = vmatpush1.msra.mxu0 0.0
    %1646 = vmatprep.subr.mxu0 0.0
    %1647 = vmatpush1.msra.mxu0 0.0
    %1648 = vmatprep.subr.mxu0 0.0
    %1649 = vmatpush1.msra.mxu0 0.0
    %1650 = vmatprep.subr.mxu0 0.0
    %1651 = vmatpush1.msra.mxu0 0.0
    %1652 = vmatprep.subr.mxu0 0.0
    %1653 = vmatpush1.msra.mxu0 0.0
    %1654 = vmatprep.subr.mxu0 0.0
    %1655 = vmatpush1.msra.mxu0 0.0
    %1656 = vmatprep.subr.mxu0 0.0
    %1657 = vmatpush1.msra.mxu0 0.0
    %1658 = vmatprep.subr.mxu0 0.0
    %1659 = vmatpush1.msra.mxu0 0.0
    %1660 = vmatprep.subr.mxu0 0.0
    %1661 = vmatpush1.msra.mxu0 0.0
    %1662 = vmatprep.subr.mxu0 0.0
    %1663 = vmatpush1.msra.mxu0 0.0
    %1664 = vmatprep.subr.mxu0 0.0
    %1665 = vmatpush1.msra.mxu0 0.0
    %1666 = vmatprep.subr.mxu0 0.0
    %1667 = vmatpush1.msra.mxu0 0.0
    %1668 = vmatprep.subr.mxu0 0.0
    %1669 = vmatpush1.msra.mxu0 0.0
    %1670 = vmatprep.subr.mxu0 0.0
    %1671 = vmatpush1.msra.mxu0 0.0
    %1672 = vmatprep.subr.mxu0 0.0
    %1673 = vmatpush1.msra.mxu0 0.0
    %1674 = vmatprep.subr.mxu0 0.0
    %1675 = vmatpush1.msra.mxu0 0.0
    %1676 = vmatprep.subr.mxu0 0.0
    %1677 = vmatpush1.msra.mxu0 0.0
    %1678 = vmatprep.mubr.f32.mxu0 0.0
    %1679 = vmatmul.mubr.f32.gmra.mrb[0].mxu0 %v1529
    %v1680 = vpop.f32.mrb[0].mxu0
    %v1681 = vadd.f32 0.0, %v1680
    %v1682 = vpop.f32.mrb[0].mxu0
    %v1683 = vadd.f32 0.0, %v1682
    %1684 = vdwg.mxu0
    %v1685 = vmax.f32 %v1610, 0.0
    %v1686 = vmax.f32 %v1612, 0.0
    %v1687 = vmax.f32 %v1681, 0.0
    %v1688 = vmax.f32 %v1683, 0.0
    %v1697 = vrot.slane %v1403, 5
    %v1698 = vrot.slane %v1409, 5
    %v1699 = vsel %vm1032, %v1697, %v1698
    %v1700 = vrot.slane %v1405, 5
    %v1701 = vrot.slane %v1411, 5
    %v1702 = vsel %vm1032, %v1700, %v1701
    %v1703 = vrot.slane %v1480, 5
    %v1704 = vrot.slane %v1486, 5
    %v1705 = vsel %vm1032, %v1703, %v1704
    %v1706 = vrot.slane %v1482, 5
    %v1707 = vrot.slane %v1488, 5
    %v1708 = vsel %vm1032, %v1706, %v1707
    %v1713 = vadd.f32 %v1685, %v1699
    %v1714 = vadd.f32 %v1686, %v1702
    %v1715 = vadd.f32 %v1687, %v1705
    %v1716 = vadd.f32 %v1688, %v1708
    %v1717 = vmax.f32 %v1713, 0.0
    %v1718 = vmax.f32 %v1714, 0.0
    %v1719 = vmax.f32 %v1715, 0.0
    %v1720 = vmax.f32 %v1716, 0.0
    %v1721 = vld [vmem:[#allocation5 + $0x60] sm:$0x3]
    %v1722 = vld [vmem:[#allocation5 + $0x62] sm:$0x1]
    %1726 = vrot.lane.b32.xlu0 %v1717, 64
    %v1727 = vpop.permute.xlu0 %1726
    %1728 = vrot.lane.b32.xlu0 %v1718, 64
    %v1729 = vpop.permute.xlu0 %1728
    %1730 = vrot.lane.b32.xlu0 %v1719, 64
    %v1731 = vpop.permute.xlu0 %1730
    %vm1732 = vcmask 523264
    %v1733 = vsel %vm1732, %v1727, %v1729
    %v1734 = vsel %vm1732, %v1729, %v1731
    %v1739 = vsel %vm1732, 0.0, %v1727
    %v1741 = vrot.slane %v1717, 3
    %v1742 = vrot.slane %v1718, 3
    %v1743 = vrot.slane %v1719, 3
    %v1744 = vrot.slane %v1720, 3
    %v1749 = vsel %vm411, %v1739, %v1741
    %v1750 = vsel %vm411, %v1733, %v1742
    %v1751 = vsel %vm411, %v1734, %v1743
    %v1752 = vsel %vm411, %v1731, %v1744
    %v1753 = vsel %vm360, %v1741, 1.0
    %v1754 = vsel %vm360, %v1742, 1.0
    %v1755 = vsel %vm360, %v1743, 1.0
    %v1756 = vsel %vm360, %v1744, 1.0
    %v1758 = vsel %vm1527, %v1721, 0
    %v1761 = vsel %vm1032, %v1753, 0
    %v1764 = vsel %vm1032, %v1754, 0
    %v1767 = vsel %vm1032, %v1755, 0
    %v1770 = vsel %vm1032, %v1756, 0
    %1772 = vmatprep.subr.mxu0 %v1750
    %1773 = vmatpush1.msra.mxu0 %v1749
    %1774 = vmatprep.subr.mxu0 %v1764
    %1775 = vmatpush1.msra.mxu0 %v1761
    %1776 = vmatprep.subr.mxu0 0.0
    %1777 = vmatpush1.msra.mxu0 0.0
    %1778 = vmatprep.subr.mxu0 0.0
    %1779 = vmatpush1.msra.mxu0 0.0
    %1780 = vmatprep.subr.mxu0 0.0
    %1781 = vmatpush1.msra.mxu0 0.0
    %1782 = vmatprep.subr.mxu0 0.0
    %1783 = vmatpush1.msra.mxu0 0.0
    %1784 = vmatprep.subr.mxu0 0.0
    %1785 = vmatpush1.msra.mxu0 0.0
    %1786 = vmatprep.subr.mxu0 0.0
    %1787 = vmatpush1.msra.mxu0 0.0
    %1788 = vmatprep.subr.mxu0 0.0
    %1789 = vmatpush1.msra.mxu0 0.0
    %1790 = vmatprep.subr.mxu0 0.0
    %1791 = vmatpush1.msra.mxu0 0.0
    %1792 = vmatprep.subr.mxu0 0.0
    %1793 = vmatpush1.msra.mxu0 0.0
    %1794 = vmatprep.subr.mxu0 0.0
    %1795 = vmatpush1.msra.mxu0 0.0
    %1796 = vmatprep.subr.mxu0 0.0
    %1797 = vmatpush1.msra.mxu0 0.0
    %1798 = vmatprep.subr.mxu0 0.0
    %1799 = vmatpush1.msra.mxu0 0.0
    %1800 = vmatprep.subr.mxu0 0.0
    %1801 = vmatpush1.msra.mxu0 0.0
    %1802 = vmatprep.subr.mxu0 0.0
    %1803 = vmatpush1.msra.mxu0 0.0
    %1804 = vmatprep.subr.mxu0 0.0
    %1805 = vmatpush1.msra.mxu0 0.0
    %1806 = vmatprep.subr.mxu0 0.0
    %1807 = vmatpush1.msra.mxu0 0.0
    %1808 = vmatprep.subr.mxu0 0.0
    %1809 = vmatpush1.msra.mxu0 0.0
    %1810 = vmatprep.subr.mxu0 0.0
    %1811 = vmatpush1.msra.mxu0 0.0
    %1812 = vmatprep.subr.mxu0 0.0
    %1813 = vmatpush1.msra.mxu0 0.0
    %1814 = vmatprep.subr.mxu0 0.0
    %1815 = vmatpush1.msra.mxu0 0.0
    %1816 = vmatprep.subr.mxu0 0.0
    %1817 = vmatpush1.msra.mxu0 0.0
    %1818 = vmatprep.subr.mxu0 0.0
    %1819 = vmatpush1.msra.mxu0 0.0
    %1820 = vmatprep.subr.mxu0 0.0
    %1821 = vmatpush1.msra.mxu0 0.0
    %1822 = vmatprep.subr.mxu0 0.0
    %1823 = vmatpush1.msra.mxu0 0.0
    %1824 = vmatprep.subr.mxu0 0.0
    %1825 = vmatpush1.msra.mxu0 0.0
    %1826 = vmatprep.subr.mxu0 0.0
    %1827 = vmatpush1.msra.mxu0 0.0
    %1828 = vmatprep.subr.mxu0 0.0
    %1829 = vmatpush1.msra.mxu0 0.0
    %1830 = vmatprep.subr.mxu0 0.0
    %1831 = vmatpush1.msra.mxu0 0.0
    %1832 = vmatprep.subr.mxu0 0.0
    %1833 = vmatpush1.msra.mxu0 0.0
    %1834 = vmatprep.subr.mxu0 0.0
    %1835 = vmatpush1.msra.mxu0 0.0
    %1836 = vmatprep.mubr.f32.mxu0 0.0
    %1837 = vmatmul.mubr.f32.gmra.mrb[0].mxu0 %v1758
    %v1838 = vpop.f32.mrb[0].mxu0
    %v1839 = vadd.f32 0.0, %v1838
    %v1840 = vpop.f32.mrb[0].mxu0
    %v1841 = vadd.f32 0.0, %v1840
    %1842 = vdwg.mxu0
    %1843 = vmatprep.subr.mxu0 %v1752
    %1844 = vmatpush1.msra.mxu0 %v1751
    %1845 = vmatprep.subr.mxu0 %v1770
    %1846 = vmatpush1.msra.mxu0 %v1767
    %1847 = vmatprep.subr.mxu0 0.0
    %1848 = vmatpush1.msra.mxu0 0.0
    %1849 = vmatprep.subr.mxu0 0.0
    %1850 = vmatpush1.msra.mxu0 0.0
    %1851 = vmatprep.subr.mxu0 0.0
    %1852 = vmatpush1.msra.mxu0 0.0
    %1853 = vmatprep.subr.mxu0 0.0
    %1854 = vmatpush1.msra.mxu0 0.0
    %1855 = vmatprep.subr.mxu0 0.0
    %1856 = vmatpush1.msra.mxu0 0.0
    %1857 = vmatprep.subr.mxu0 0.0
    %1858 = vmatpush1.msra.mxu0 0.0
    %1859 = vmatprep.subr.mxu0 0.0
    %1860 = vmatpush1.msra.mxu0 0.0
    %1861 = vmatprep.subr.mxu0 0.0
    %1862 = vmatpush1.msra.mxu0 0.0
    %1863 = vmatprep.subr.mxu0 0.0
    %1864 = vmatpush1.msra.mxu0 0.0
    %1865 = vmatprep.subr.mxu0 0.0
    %1866 = vmatpush1.msra.mxu0 0.0
    %1867 = vmatprep.subr.mxu0 0.0
    %1868 = vmatpush1.msra.mxu0 0.0
    %1869 = vmatprep.subr.mxu0 0.0
    %1870 = vmatpush1.msra.mxu0 0.0
    %1871 = vmatprep.subr.mxu0 0.0
    %1872 = vmatpush1.msra.mxu0 0.0
    %1873 = vmatprep.subr.mxu0 0.0
    %1874 = vmatpush1.msra.mxu0 0.0
    %1875 = vmatprep.subr.mxu0 0.0
    %1876 = vmatpush1.msra.mxu0 0.0
    %1877 = vmatprep.subr.mxu0 0.0
    %1878 = vmatpush1.msra.mxu0 0.0
    %1879 = vmatprep.subr.mxu0 0.0
    %1880 = vmatpush1.msra.mxu0 0.0
    %1881 = vmatprep.subr.mxu0 0.0
    %1882 = vmatpush1.msra.mxu0 0.0
    %1883 = vmatprep.subr.mxu0 0.0
    %1884 = vmatpush1.msra.mxu0 0.0
    %1885 = vmatprep.subr.mxu0 0.0
    %1886 = vmatpush1.msra.mxu0 0.0
    %1887 = vmatprep.subr.mxu0 0.0
    %1888 = vmatpush1.msra.mxu0 0.0
    %1889 = vmatprep.subr.mxu0 0.0
    %1890 = vmatpush1.msra.mxu0 0.0
    %1891 = vmatprep.subr.mxu0 0.0
    %1892 = vmatpush1.msra.mxu0 0.0
    %1893 = vmatprep.subr.mxu0 0.0
    %1894 = vmatpush1.msra.mxu0 0.0
    %1895 = vmatprep.subr.mxu0 0.0
    %1896 = vmatpush1.msra.mxu0 0.0
    %1897 = vmatprep.subr.mxu0 0.0
    %1898 = vmatpush1.msra.mxu0 0.0
    %1899 = vmatprep.subr.mxu0 0.0
    %1900 = vmatpush1.msra.mxu0 0.0
    %1901 = vmatprep.subr.mxu0 0.0
    %1902 = vmatpush1.msra.mxu0 0.0
    %1903 = vmatprep.subr.mxu0 0.0
    %1904 = vmatpush1.msra.mxu0 0.0
    %1905 = vmatprep.subr.mxu0 0.0
    %1906 = vmatpush1.msra.mxu0 0.0
    %1907 = vmatprep.mubr.f32.mxu0 0.0
    %1908 = vmatmul.mubr.f32.gmra.mrb[0].mxu0 %v1758
    %v1909 = vpop.f32.mrb[0].mxu0
    %v1910 = vadd.f32 0.0, %v1909
    %v1911 = vpop.f32.mrb[0].mxu0
    %v1912 = vadd.f32 0.0, %v1911
    %1913 = vdwg.mxu0
    %v1914 = vmax.f32 %v1839, 0.0
    %v1915 = vmax.f32 %v1841, 0.0
    %v1916 = vmax.f32 %v1910, 0.0
    %v1917 = vmax.f32 %v1912, 0.0
    %1921 = vrot.lane.b32.xlu0 %v1914, 64
    %v1922 = vpop.permute.xlu0 %1921
    %1923 = vrot.lane.b32.xlu0 %v1915, 64
    %v1924 = vpop.permute.xlu0 %1923
    %1925 = vrot.lane.b32.xlu0 %v1916, 64
    %v1926 = vpop.permute.xlu0 %1925
    %v1927 = vsel %vm1732, %v1922, %v1924
    %v1928 = vsel %vm1732, %v1924, %v1926
    %v1933 = vsel %vm1732, 0.0, %v1922
    %v1935 = vrot.slane %v1914, 7
    %v1936 = vrot.slane %v1915, 7
    %v1937 = vrot.slane %v1916, 7
    %v1938 = vrot.slane %v1917, 7
    %v1943 = vsel %vm94, %v1933, %v1935
    %v1944 = vsel %vm94, %v1927, %v1936
    %v1945 = vsel %vm94, %v1928, %v1937
    %v1946 = vsel %vm94, %v1926, %v1938
    %v1947 = vsel %vm360, %v1943, 1.0
    %v1948 = vsel %vm360, %v1944, 1.0
    %v1949 = vsel %vm360, %v1945, 1.0
    %v1950 = vsel %vm360, %v1946, 1.0
    %vm1951 = vcmask 23552
    %v1953 = vsel %vm1951, %v1722, 0
    %v1956 = vsel %vm1032, %v1947, 0
    %v1959 = vsel %vm1032, %v1948, 0
    %v1962 = vsel %vm1032, %v1949, 0
    %v1965 = vsel %vm1032, %v1950, 0
    %1967 = vmatprep.subr.mxu0 %v1959
    %1968 = vmatpush1.msra.mxu0 %v1956
    %1969 = vmatprep.subr.mxu0 0.0
    %1970 = vmatpush1.msra.mxu0 0.0
    %1971 = vmatprep.subr.mxu0 0.0
    %1972 = vmatpush1.msra.mxu0 0.0
    %1973 = vmatprep.subr.mxu0 0.0
    %1974 = vmatpush1.msra.mxu0 0.0
    %1975 = vmatprep.subr.mxu0 0.0
    %1976 = vmatpush1.msra.mxu0 0.0
    %1977 = vmatprep.subr.mxu0 0.0
    %1978 = vmatpush1.msra.mxu0 0.0
    %1979 = vmatprep.subr.mxu0 0.0
    %1980 = vmatpush1.msra.mxu0 0.0
    %1981 = vmatprep.subr.mxu0 0.0
    %1982 = vmatpush1.msra.mxu0 0.0
    %1983 = vmatprep.subr.mxu0 0.0
    %1984 = vmatpush1.msra.mxu0 0.0
    %1985 = vmatprep.subr.mxu0 0.0
    %1986 = vmatpush1.msra.mxu0 0.0
    %1987 = vmatprep.subr.mxu0 0.0
    %1988 = vmatpush1.msra.mxu0 0.0
    %1989 = vmatprep.subr.mxu0 0.0
    %1990 = vmatpush1.msra.mxu0 0.0
    %1991 = vmatprep.subr.mxu0 0.0
    %1992 = vmatpush1.msra.mxu0 0.0
    %1993 = vmatprep.subr.mxu0 0.0
    %1994 = vmatpush1.msra.mxu0 0.0
    %1995 = vmatprep.subr.mxu0 0.0
    %1996 = vmatpush1.msra.mxu0 0.0
    %1997 = vmatprep.subr.mxu0 0.0
    %1998 = vmatpush1.msra.mxu0 0.0
    %1999 = vmatprep.subr.mxu0 0.0
    %2000 = vmatpush1.msra.mxu0 0.0
    %2001 = vmatprep.subr.mxu0 0.0
    %2002 = vmatpush1.msra.mxu0 0.0
    %2003 = vmatprep.subr.mxu0 0.0
    %2004 = vmatpush1.msra.mxu0 0.0
    %2005 = vmatprep.subr.mxu0 0.0
    %2006 = vmatpush1.msra.mxu0 0.0
    %2007 = vmatprep.subr.mxu0 0.0
    %2008 = vmatpush1.msra.mxu0 0.0
    %2009 = vmatprep.subr.mxu0 0.0
    %2010 = vmatpush1.msra.mxu0 0.0
    %2011 = vmatprep.subr.mxu0 0.0
    %2012 = vmatpush1.msra.mxu0 0.0
    %2013 = vmatprep.subr.mxu0 0.0
    %2014 = vmatpush1.msra.mxu0 0.0
    %2015 = vmatprep.subr.mxu0 0.0
    %2016 = vmatpush1.msra.mxu0 0.0
    %2017 = vmatprep.subr.mxu0 0.0
    %2018 = vmatpush1.msra.mxu0 0.0
    %2019 = vmatprep.subr.mxu0 0.0
    %2020 = vmatpush1.msra.mxu0 0.0
    %2021 = vmatprep.subr.mxu0 0.0
    %2022 = vmatpush1.msra.mxu0 0.0
    %2023 = vmatprep.subr.mxu0 0.0
    %2024 = vmatpush1.msra.mxu0 0.0
    %2025 = vmatprep.subr.mxu0 0.0
    %2026 = vmatpush1.msra.mxu0 0.0
    %2027 = vmatprep.subr.mxu0 0.0
    %2028 = vmatpush1.msra.mxu0 0.0
    %2029 = vmatprep.subr.mxu0 0.0
    %2030 = vmatpush1.msra.mxu0 0.0
    %2031 = vmatprep.mubr.f32.mxu0 0.0
    %2032 = vmatmul.mubr.f32.gmra.mrb[0].mxu0 %v1953
    %v2033 = vpop.f32.mrb[0].mxu0
    %v2034 = vadd.f32 0.0, %v2033
    %v2035 = vpop.f32.mrb[0].mxu0
    %v2036 = vadd.f32 0.0, %v2035
    %2037 = vdwg.mxu0
    %2038 = vmatprep.subr.mxu0 %v1965
    %2039 = vmatpush1.msra.mxu0 %v1962
    %2040 = vmatprep.subr.mxu0 0.0
    %2041 = vmatpush1.msra.mxu0 0.0
    %2042 = vmatprep.subr.mxu0 0.0
    %2043 = vmatpush1.msra.mxu0 0.0
    %2044 = vmatprep.subr.mxu0 0.0
    %2045 = vmatpush1.msra.mxu0 0.0
    %2046 = vmatprep.subr.mxu0 0.0
    %2047 = vmatpush1.msra.mxu0 0.0
    %2048 = vmatprep.subr.mxu0 0.0
    %2049 = vmatpush1.msra.mxu0 0.0
    %2050 = vmatprep.subr.mxu0 0.0
    %2051 = vmatpush1.msra.mxu0 0.0
    %2052 = vmatprep.subr.mxu0 0.0
    %2053 = vmatpush1.msra.mxu0 0.0
    %2054 = vmatprep.subr.mxu0 0.0
    %2055 = vmatpush1.msra.mxu0 0.0
    %2056 = vmatprep.subr.mxu0 0.0
    %2057 = vmatpush1.msra.mxu0 0.0
    %2058 = vmatprep.subr.mxu0 0.0
    %2059 = vmatpush1.msra.mxu0 0.0
    %2060 = vmatprep.subr.mxu0 0.0
    %2061 = vmatpush1.msra.mxu0 0.0
    %2062 = vmatprep.subr.mxu0 0.0
    %2063 = vmatpush1.msra.mxu0 0.0
    %2064 = vmatprep.subr.mxu0 0.0
    %2065 = vmatpush1.msra.mxu0 0.0
    %2066 = vmatprep.subr.mxu0 0.0
    %2067 = vmatpush1.msra.mxu0 0.0
    %2068 = vmatprep.subr.mxu0 0.0
    %2069 = vmatpush1.msra.mxu0 0.0
    %2070 = vmatprep.subr.mxu0 0.0
    %2071 = vmatpush1.msra.mxu0 0.0
    %2072 = vmatprep.subr.mxu0 0.0
    %2073 = vmatpush1.msra.mxu0 0.0
    %2074 = vmatprep.subr.mxu0 0.0
    %2075 = vmatpush1.msra.mxu0 0.0
    %2076 = vmatprep.subr.mxu0 0.0
    %2077 = vmatpush1.msra.mxu0 0.0
    %2078 = vmatprep.subr.mxu0 0.0
    %2079 = vmatpush1.msra.mxu0 0.0
    %2080 = vmatprep.subr.mxu0 0.0
    %2081 = vmatpush1.msra.mxu0 0.0
    %2082 = vmatprep.subr.mxu0 0.0
    %2083 = vmatpush1.msra.mxu0 0.0
    %2084 = vmatprep.subr.mxu0 0.0
    %2085 = vmatpush1.msra.mxu0 0.0
    %2086 = vmatprep.subr.mxu0 0.0
    %2087 = vmatpush1.msra.mxu0 0.0
    %2088 = vmatprep.subr.mxu0 0.0
    %2089 = vmatpush1.msra.mxu0 0.0
    %2090 = vmatprep.subr.mxu0 0.0
    %2091 = vmatpush1.msra.mxu0 0.0
    %2092 = vmatprep.subr.mxu0 0.0
    %2093 = vmatpush1.msra.mxu0 0.0
    %2094 = vmatprep.subr.mxu0 0.0
    %2095 = vmatpush1.msra.mxu0 0.0
    %2096 = vmatprep.subr.mxu0 0.0
    %2097 = vmatpush1.msra.mxu0 0.0
    %2098 = vmatprep.subr.mxu0 0.0
    %2099 = vmatpush1.msra.mxu0 0.0
    %2100 = vmatprep.subr.mxu0 0.0
    %2101 = vmatpush1.msra.mxu0 0.0
    %2102 = vmatprep.mubr.f32.mxu0 0.0
    %2103 = vmatmul.mubr.f32.gmra.mrb[0].mxu0 %v1953
    %v2104 = vpop.f32.mrb[0].mxu0
    %v2105 = vadd.f32 0.0, %v2104
    %v2106 = vpop.f32.mrb[0].mxu0
    %v2107 = vadd.f32 0.0, %v2106
    %2108 = vdwg.mxu0
    %v2109 = vmax.f32 %v2034, 0.0
    %v2110 = vmax.f32 %v2036, 0.0
    %v2111 = vmax.f32 %v2105, 0.0
    %v2112 = vmax.f32 %v2107, 0.0
    %v2117 = vrot.slane %v1839, 1
    %v2118 = vrot.slane %v1841, 1
    %v2119 = vrot.slane %v1910, 1
    %v2120 = vrot.slane %v1912, 1
    %v2125 = vadd.f32 %v2109, %v2117
    %v2126 = vadd.f32 %v2110, %v2118
    %v2127 = vadd.f32 %v2111, %v2119
    %v2128 = vadd.f32 %v2112, %v2120
    %v2129 = vmax.f32 %v2125, 0.0
    %v2130 = vmax.f32 %v2126, 0.0
    %v2131 = vmax.f32 %v2127, 0.0
    %v2132 = vmax.f32 %v2128, 0.0
    %v2134 = vrot.slane %v2129, 7
    %2135 = vrot.lane.b32.xlu0 %v2134, 120
    %v2136 = vpop.permute.xlu0 %2135
    %v2138 = vrot.slane %v2129, 6
    %2139 = vrot.lane.b32.xlu0 %v2138, 112
    %v2140 = vpop.permute.xlu0 %2139
    %v2142 = vrot.slane %v2129, 5
    %2143 = vrot.lane.b32.xlu0 %v2142, 104
    %v2144 = vpop.permute.xlu0 %2143
    %v2146 = vrot.slane %v2129, 4
    %2147 = vrot.lane.b32.xlu0 %v2146, 96
    %v2148 = vpop.permute.xlu0 %2147
    %v2150 = vrot.slane %v2129, 3
    %2151 = vrot.lane.b32.xlu0 %v2150, 88
    %v2152 = vpop.permute.xlu0 %2151
    %v2154 = vrot.slane %v2129, 2
    %2155 = vrot.lane.b32.xlu0 %v2154, 80
    %v2156 = vpop.permute.xlu0 %2155
    %v2158 = vrot.slane %v2129, 1
    %2159 = vrot.lane.b32.xlu0 %v2158, 72
    %v2160 = vpop.permute.xlu0 %2159
    %2162 = vrot.lane.b32.xlu0 %v2129, 64
    %v2163 = vpop.permute.xlu0 %2162
    %2165 = vrot.lane.b32.xlu0 %v2134, 56
    %v2166 = vpop.permute.xlu0 %2165
    %2168 = vrot.lane.b32.xlu0 %v2138, 48
    %v2169 = vpop.permute.xlu0 %2168
    %2171 = vrot.lane.b32.xlu0 %v2142, 40
    %v2172 = vpop.permute.xlu0 %2171
    %2174 = vrot.lane.b32.xlu0 %v2146, 32
    %v2175 = vpop.permute.xlu0 %2174
    %2177 = vrot.lane.b32.xlu0 %v2150, 24
    %v2178 = vpop.permute.xlu0 %2177
    %2180 = vrot.lane.b32.xlu0 %v2154, 16
    %v2181 = vpop.permute.xlu0 %2180
    %2183 = vrot.lane.b32.xlu0 %v2158, 8
    %v2184 = vpop.permute.xlu0 %2183
    %v2186 = vsel %vm94, %v2129, %v2136
    %v2187 = vsel %vm360, %v2186, %v2140
    %v2188 = vsel %vm1032, %v2187, %v2144
    %v2189 = vsel %vm73, %v2188, %v2148
    %v2190 = vsel %vm411, %v2189, %v2152
    %v2191 = vsel %vm614, %v2190, %v2156
    %v2192 = vsel %vm1215, %v2191, %v2160
    %v2193 = vsel %vm94, %v2163, %v2166
    %v2194 = vsel %vm360, %v2193, %v2169
    %v2195 = vsel %vm1032, %v2194, %v2172
    %v2196 = vsel %vm73, %v2195, %v2175
    %v2197 = vsel %vm411, %v2196, %v2178
    %v2198 = vsel %vm614, %v2197, %v2181
    %v2199 = vsel %vm1215, %v2198, %v2184
    %v2201 = vrot.slane %v2130, 7
    %2202 = vrot.lane.b32.xlu0 %v2201, 120
    %v2203 = vpop.permute.xlu0 %2202
    %v2205 = vrot.slane %v2130, 6
    %2206 = vrot.lane.b32.xlu0 %v2205, 112
    %v2207 = vpop.permute.xlu0 %2206
    %v2209 = vrot.slane %v2130, 5
    %2210 = vrot.lane.b32.xlu0 %v2209, 104
    %v2211 = vpop.permute.xlu0 %2210
    %v2213 = vrot.slane %v2130, 4
    %2214 = vrot.lane.b32.xlu0 %v2213, 96
    %v2215 = vpop.permute.xlu0 %2214
    %v2217 = vrot.slane %v2130, 3
    %2218 = vrot.lane.b32.xlu0 %v2217, 88
    %v2219 = vpop.permute.xlu0 %2218
    %v2221 = vrot.slane %v2130, 2
    %2222 = vrot.lane.b32.xlu0 %v2221, 80
    %v2223 = vpop.permute.xlu0 %2222
    %v2225 = vrot.slane %v2130, 1
    %2226 = vrot.lane.b32.xlu0 %v2225, 72
    %v2227 = vpop.permute.xlu0 %2226
    %2229 = vrot.lane.b32.xlu0 %v2130, 64
    %v2230 = vpop.permute.xlu0 %2229
    %2232 = vrot.lane.b32.xlu0 %v2201, 56
    %v2233 = vpop.permute.xlu0 %2232
    %2235 = vrot.lane.b32.xlu0 %v2205, 48
    %v2236 = vpop.permute.xlu0 %2235
    %2238 = vrot.lane.b32.xlu0 %v2209, 40
    %v2239 = vpop.permute.xlu0 %2238
    %2241 = vrot.lane.b32.xlu0 %v2213, 32
    %v2242 = vpop.permute.xlu0 %2241
    %2244 = vrot.lane.b32.xlu0 %v2217, 24
    %v2245 = vpop.permute.xlu0 %2244
    %2247 = vrot.lane.b32.xlu0 %v2221, 16
    %v2248 = vpop.permute.xlu0 %2247
    %2250 = vrot.lane.b32.xlu0 %v2225, 8
    %v2251 = vpop.permute.xlu0 %2250
    %v2253 = vsel %vm94, %v2130, %v2203
    %v2254 = vsel %vm360, %v2253, %v2207
    %v2255 = vsel %vm1032, %v2254, %v2211
    %v2256 = vsel %vm73, %v2255, %v2215
    %v2257 = vsel %vm411, %v2256, %v2219
    %v2258 = vsel %vm614, %v2257, %v2223
    %v2259 = vsel %vm1215, %v2258, %v2227
    %v2260 = vsel %vm94, %v2230, %v2233
    %v2261 = vsel %vm360, %v2260, %v2236
    %v2262 = vsel %vm1032, %v2261, %v2239
    %v2263 = vsel %vm73, %v2262, %v2242
    %v2264 = vsel %vm411, %v2263, %v2245
    %v2265 = vsel %vm614, %v2264, %v2248
    %v2266 = vsel %vm1215, %v2265, %v2251
    %v2268 = vrot.slane %v2131, 7
    %2269 = vrot.lane.b32.xlu0 %v2268, 120
    %v2270 = vpop.permute.xlu0 %2269
    %v2272 = vrot.slane %v2131, 6
    %2273 = vrot.lane.b32.xlu0 %v2272, 112
    %v2274 = vpop.permute.xlu0 %2273
    %v2276 = vrot.slane %v2131, 5
    %2277 = vrot.lane.b32.xlu0 %v2276, 104
    %v2278 = vpop.permute.xlu0 %2277
    %v2280 = vrot.slane %v2131, 4
    %2281 = vrot.lane.b32.xlu0 %v2280, 96
    %v2282 = vpop.permute.xlu0 %2281
    %v2284 = vrot.slane %v2131, 3
    %2285 = vrot.lane.b32.xlu0 %v2284, 88
    %v2286 = vpop.permute.xlu0 %2285
    %v2288 = vrot.slane %v2131, 2
    %2289 = vrot.lane.b32.xlu0 %v2288, 80
    %v2290 = vpop.permute.xlu0 %2289
    %v2292 = vrot.slane %v2131, 1
    %2293 = vrot.lane.b32.xlu0 %v2292, 72
    %v2294 = vpop.permute.xlu0 %2293
    %2296 = vrot.lane.b32.xlu0 %v2131, 64
    %v2297 = vpop.permute.xlu0 %2296
    %2299 = vrot.lane.b32.xlu0 %v2268, 56
    %v2300 = vpop.permute.xlu0 %2299
    %2302 = vrot.lane.b32.xlu0 %v2272, 48
    %v2303 = vpop.permute.xlu0 %2302
    %2305 = vrot.lane.b32.xlu0 %v2276, 40
    %v2306 = vpop.permute.xlu0 %2305
    %2308 = vrot.lane.b32.xlu0 %v2280, 32
    %v2309 = vpop.permute.xlu0 %2308
    %2311 = vrot.lane.b32.xlu0 %v2284, 24
    %v2312 = vpop.permute.xlu0 %2311
    %2314 = vrot.lane.b32.xlu0 %v2288, 16
    %v2315 = vpop.permute.xlu0 %2314
    %2317 = vrot.lane.b32.xlu0 %v2292, 8
    %v2318 = vpop.permute.xlu0 %2317
    %v2320 = vsel %vm94, %v2131, %v2270
    %v2321 = vsel %vm360, %v2320, %v2274
    %v2322 = vsel %vm1032, %v2321, %v2278
    %v2323 = vsel %vm73, %v2322, %v2282
    %v2324 = vsel %vm411, %v2323, %v2286
    %v2325 = vsel %vm614, %v2324, %v2290
    %v2326 = vsel %vm1215, %v2325, %v2294
    %v2327 = vsel %vm94, %v2297, %v2300
    %v2328 = vsel %vm360, %v2327, %v2303
    %v2329 = vsel %vm1032, %v2328, %v2306
    %v2330 = vsel %vm73, %v2329, %v2309
    %v2331 = vsel %vm411, %v2330, %v2312
    %v2332 = vsel %vm614, %v2331, %v2315
    %v2333 = vsel %vm1215, %v2332, %v2318
    %v2335 = vrot.slane %v2132, 7
    %2336 = vrot.lane.b32.xlu0 %v2335, 120
    %v2337 = vpop.permute.xlu0 %2336
    %v2339 = vsel %vm94, %v2132, %v2337
    %v2340 = vsel %vm360, %v2339, 1.0
    %v2341 = vld [vmem:[#allocation5 + $0x63] sm:$0xff]
    %v2342 = vld [vmem:[#allocation5 + $0x6b] sm:$0xff]
    %v2343 = vld [vmem:[#allocation5 + $0x73] sm:$0xf]
    %vm2344 = vcmask 416768
    %v2346 = vsel %vm2344, %v2341, 0
    %v2349 = vsel %vm2344, %v2342, 0
    %v2352 = vsel %vm2344, %v2343, 0
    %v2355 = vsel %vm1032, %v2340, 0
    %2357 = vmatprep.subr.mxu0 0.0
    %2358 = vmatpush1.msra.mxu0 %v2192
    %2359 = vmatprep.subr.mxu0 0.0
    %2360 = vmatpush1.msra.mxu0 %v2199
    %2361 = vmatprep.subr.mxu0 0.0
    %2362 = vmatpush1.msra.mxu0 %v2259
    %2363 = vmatprep.subr.mxu0 0.0
    %2364 = vmatpush1.msra.mxu0 %v2266
    %2365 = vmatprep.subr.mxu0 0.0
    %2366 = vmatpush1.msra.mxu0 %v2326
    %2367 = vmatprep.subr.mxu0 0.0
    %2368 = vmatpush1.msra.mxu0 %v2333
    %2369 = vmatprep.subr.mxu0 0.0
    %2370 = vmatpush1.msra.mxu0 %v2355
    %2371 = vmatprep.subr.mxu0 0.0
    %2372 = vmatpush1.msra.mxu0 0.0
    %2373 = vmatprep.subr.mxu0 0.0
    %2374 = vmatpush1.msra.mxu0 0.0
    %2375 = vmatprep.subr.mxu0 0.0
    %2376 = vmatpush1.msra.mxu0 0.0
    %2377 = vmatprep.subr.mxu0 0.0
    %2378 = vmatpush1.msra.mxu0 0.0
    %2379 = vmatprep.subr.mxu0 0.0
    %2380 = vmatpush1.msra.mxu0 0.0
    %2381 = vmatprep.subr.mxu0 0.0
    %2382 = vmatpush1.msra.mxu0 0.0
    %2383 = vmatprep.subr.mxu0 0.0
    %2384 = vmatpush1.msra.mxu0 0.0
    %2385 = vmatprep.subr.mxu0 0.0
    %2386 = vmatpush1.msra.mxu0 0.0
    %2387 = vmatprep.subr.mxu0 0.0
    %2388 = vmatpush1.msra.mxu0 0.0
    %2389 = vmatprep.subr.mxu0 0.0
    %2390 = vmatpush1.msra.mxu0 0.0
    %2391 = vmatprep.subr.mxu0 0.0
    %2392 = vmatpush1.msra.mxu0 0.0
    %2393 = vmatprep.subr.mxu0 0.0
    %2394 = vmatpush1.msra.mxu0 0.0
    %2395 = vmatprep.subr.mxu0 0.0
    %2396 = vmatpush1.msra.mxu0 0.0
    %2397 = vmatprep.subr.mxu0 0.0
    %2398 = vmatpush1.msra.mxu0 0.0
    %2399 = vmatprep.subr.mxu0 0.0
    %2400 = vmatpush1.msra.mxu0 0.0
    %2401 = vmatprep.subr.mxu0 0.0
    %2402 = vmatpush1.msra.mxu0 0.0
    %2403 = vmatprep.subr.mxu0 0.0
    %2404 = vmatpush1.msra.mxu0 0.0
    %2405 = vmatprep.subr.mxu0 0.0
    %2406 = vmatpush1.msra.mxu0 0.0
    %2407 = vmatprep.subr.mxu0 0.0
    %2408 = vmatpush1.msra.mxu0 0.0
    %2409 = vmatprep.subr.mxu0 0.0
    %2410 = vmatpush1.msra.mxu0 0.0
    %2411 = vmatprep.subr.mxu0 0.0
    %2412 = vmatpush1.msra.mxu0 0.0
    %2413 = vmatprep.subr.mxu0 0.0
    %2414 = vmatpush1.msra.mxu0 0.0
    %2415 = vmatprep.subr.mxu0 0.0
    %2416 = vmatpush1.msra.mxu0 0.0
    %2417 = vmatprep.subr.mxu0 0.0
    %2418 = vmatpush1.msra.mxu0 0.0
    %2419 = vmatprep.subr.mxu0 0.0
    %2420 = vmatpush1.msra.mxu0 0.0
    %2421 = vmatprep.mubr.f32.mxu0 0.0
    %2422 = vmatmul.mubr.f32.gmra.mrb[0].mxu0 %v2346
    %v2423 = vpop.f32.mrb[0].mxu0
    %v2424 = vadd.f32 0.0, %v2423
    %v2425 = vpop.f32.mrb[0].mxu0
    %2426 = vmatprep.mubr.f32.mxu0 0.0
    %2427 = vmatmul.mubr.f32.gmra.mrb[0].mxu0 %v2349
    %v2428 = vpop.f32.mrb[0].mxu0
    %v2429 = vadd.f32 0.0, %v2428
    %v2430 = vpop.f32.mrb[0].mxu0
    %2431 = vmatprep.mubr.f32.mxu0 0.0
    %2432 = vmatmul.mubr.f32.gmra.mrb[0].mxu0 %v2352
    %v2433 = vpop.f32.mrb[0].mxu0
    %v2434 = vadd.f32 0.0, %v2433
    %v2435 = vpop.f32.mrb[0].mxu0
    %2436 = vdwg.mxu0
    %v2437 = vmax.f32 %v2424, 0.0
    %v2438 = vmax.f32 %v2429, 0.0
    %v2439 = vmax.f32 %v2434, 0.0
    %v2440 = vmin.f32 %v2437, 6.0
    %v2441 = vmin.f32 %v2438, 6.0
    %v2442 = vmin.f32 %v2439, 6.0
    %v2443 = vld [vmem:[#allocation5 + $0x77] sm:$0x3]
    %2445 = vset.pattern.permute.xlu0 20
    %2446 = vperm.xlu0 %2445, %v2443
    %v2447 = vpop.permute.xlu0 %2446
    %vm2449 = vcmask 162816
    %v2450 = vsel %vm2449, %v2443, 0
    %v2453 = vsel %vm73, %v2442, 0
    %2455 = vmatprep.subr.mxu0 0.0
    %2456 = vmatpush1.msra.mxu0 %v2440
    %2457 = vmatprep.subr.mxu0 0.0
    %2458 = vmatpush1.msra.mxu0 %v2441
    %2459 = vmatprep.subr.mxu0 0.0
    %2460 = vmatpush1.msra.mxu0 %v2453
    %2461 = vmatprep.subr.mxu0 0.0
    %2462 = vmatpush1.msra.mxu0 0.0
    %2463 = vmatprep.subr.mxu0 0.0
    %2464 = vmatpush1.msra.mxu0 0.0
    %2465 = vmatprep.subr.mxu0 0.0
    %2466 = vmatpush1.msra.mxu0 0.0
    %2467 = vmatprep.subr.mxu0 0.0
    %2468 = vmatpush1.msra.mxu0 0.0
    %2469 = vmatprep.subr.mxu0 0.0
    %2470 = vmatpush1.msra.mxu0 0.0
    %2471 = vmatprep.subr.mxu0 0.0
    %2472 = vmatpush1.msra.mxu0 0.0
    %2473 = vmatprep.subr.mxu0 0.0
    %2474 = vmatpush1.msra.mxu0 0.0
    %2475 = vmatprep.subr.mxu0 0.0
    %2476 = vmatpush1.msra.mxu0 0.0
    %2477 = vmatprep.subr.mxu0 0.0
    %2478 = vmatpush1.msra.mxu0 0.0
    %2479 = vmatprep.subr.mxu0 0.0
    %2480 = vmatpush1.msra.mxu0 0.0
    %2481 = vmatprep.subr.mxu0 0.0
    %2482 = vmatpush1.msra.mxu0 0.0
    %2483 = vmatprep.subr.mxu0 0.0
    %2484 = vmatpush1.msra.mxu0 0.0
    %2485 = vmatprep.subr.mxu0 0.0
    %2486 = vmatpush1.msra.mxu0 0.0
    %2487 = vmatprep.subr.mxu0 0.0
    %2488 = vmatpush1.msra.mxu0 0.0
    %2489 = vmatprep.subr.mxu0 0.0
    %2490 = vmatpush1.msra.mxu0 0.0
    %2491 = vmatprep.subr.mxu0 0.0
    %2492 = vmatpush1.msra.mxu0 0.0
    %2493 = vmatprep.subr.mxu0 0.0
    %2494 = vmatpush1.msra.mxu0 0.0
    %2495 = vmatprep.subr.mxu0 0.0
    %2496 = vmatpush1.msra.mxu0 0.0
    %2497 = vmatprep.subr.mxu0 0.0
    %2498 = vmatpush1.msra.mxu0 0.0
    %2499 = vmatprep.subr.mxu0 0.0
    %2500 = vmatpush1.msra.mxu0 0.0
    %2501 = vmatprep.subr.mxu0 0.0
    %2502 = vmatpush1.msra.mxu0 0.0
    %2503 = vmatprep.subr.mxu0 0.0
    %2504 = vmatpush1.msra.mxu0 0.0
    %2505 = vmatprep.subr.mxu0 0.0
    %2506 = vmatpush1.msra.mxu0 0.0
    %2507 = vmatprep.subr.mxu0 0.0
    %2508 = vmatpush1.msra.mxu0 0.0
    %2509 = vmatprep.subr.mxu0 0.0
    %2510 = vmatpush1.msra.mxu0 0.0
    %2511 = vmatprep.subr.mxu0 0.0
    %2512 = vmatpush1.msra.mxu0 0.0
    %2513 = vmatprep.subr.mxu0 0.0
    %2514 = vmatpush1.msra.mxu0 0.0
    %2515 = vmatprep.subr.mxu0 0.0
    %2516 = vmatpush1.msra.mxu0 0.0
    %2517 = vmatprep.subr.mxu0 0.0
    %2518 = vmatpush1.msra.mxu0 0.0
    %2519 = vmatprep.mubr.f32.mxu0 0.0
    %2520 = vmatmul.mubr.f32.gmra.mrb[0].mxu0 %v2450
    %v2521 = vpop.f32.mrb[0].mxu0
    %v2522 = vadd.f32 %v2447, %v2521
    %v2523 = vpop.f32.mrb[0].mxu0
    %2524 = vdwg.mxu0
    %vm2525 = vcmask 58368
    %v2526 = vsel %vm2525, %v2522, -inf
    %v2527 = vrot.slane %v2526, 4
    %v2528 = vmax.f32 %v2526, %v2527
    %v2529 = vrot.slane %v2528, 2
    %v2530 = vmax.f32 %v2528, %v2529
    %v2531 = vrot.slane %v2530, 1
    %v2532 = vmax.f32 %v2530, %v2531
    %v2533 = vsub.f32 %v2522, %v2532
    %v2534 = vmul.f32 %v2533, 1.442695
    %v2535 = vpow.pop %v2534
    %v2536 = vsel %vm2525, %v2535, 0.0
    %v2537 = vrot.slane %v2536, 4
    %v2538 = vadd.f32 %v2536, %v2537
    %v2539 = vrot.slane %v2538, 2
    %v2540 = vadd.f32 %v2538, %v2539
    %v2541 = vrot.slane %v2540, 1
    %v2542 = vadd.f32 %v2540, %v2541
    %v2543 = vrcp.pop %v2542
    %v2544 = vmul.f32 %v2535, %v2543
    %2545 = vst.msk [vmem:[#allocation7] sm:$0x3] %vm2525, %v2544
    // Predicated region
    $region18: #{tpu_custom_call.1} parent=1 // pred_check
      _
    $region19: #{tpu_custom_call.1} parent=1 // pred_check_branch
      %2547 = sbr.rel (0) target = $region21
    $region20: #{tpu_custom_call.1} parent=1 // pred_region
      %s2549 = ssub.s32 32, 32
      %2550 = vsyncadd [#allocation4], %s2549
      %s2552 = sshll.u32 [#allocation7], 4
      %s2553 = int_to_ptr.vmem [resolvable:$true] %s2552
      %2555 = dma.vmem_to_hbm [thread:$0]  %s2553, 32, %s2, [#allocation4]
    $region21: #{tpu_custom_call.1} parent=1 // pred_fallthru
      _
    // Predicated region
    $region22: #{tpu_custom_call.1} parent=1 // pred_check
      _
    $region23: #{tpu_custom_call.1} parent=1 // pred_check_branch
      %2557 = sbr.rel (0) target = $region25
    $region24: #{tpu_custom_call.1} parent=1 // pred_region
      %2558 = dma.done [#allocation4], 32
    $region25: #{tpu_custom_call.1} parent=1 // pred_fallthru
      _
    %2559 = vsyncpa [#allocation3], 1
    %2560 = vsyncpa [#allocation6], 1
    %2561 = vsyncpa [#allocation4], 1

</llo_original>
